<compile_context>
chip_gen: v5e
topology: v5e:2x2
jax: 0.10.0
libtpu: 0.0.40
codegen_flags: <defaults>
</compile_context>

<pallas_src>
import functools
import math

import jax
import jax.numpy as jnp
from jax.experimental import pallas as pl
from jax.experimental.pallas import tpu as pltpu

# ------------------------- config (small, synthetic) -------------------------
VOCAB   = 64
SEQ_LEN = 8
N_EMBED = 32
N_HEAD  = 4
N_LAYER = 2
LN_EPS  = 1e-5

MATMUL_DTYPE = jnp.bfloat16   # MXU-native operand dtype; accumulation is f32.


# ------------------------------ shared helpers --------------------------------
def _ln(x, g, b):
    """LayerNorm over last axis, f32 math, biased variance (matches torch)."""
    mu = jnp.mean(x, axis=-1, keepdims=True)
    xc = x - mu
    var = jnp.mean(xc * xc, axis=-1, keepdims=True)
    return xc * jax.lax.rsqrt(var + LN_EPS) * g + b


def _gelu(x):
    # GELU (tanh approximation).
    # TODO(synk): reference DecoderBlock is not shown; if it uses nn.GELU()
    # default (exact erf), swap to 0.5*x*(1+erf(x/sqrt(2))).
    c = math.sqrt(2.0 / math.pi)
    return 0.5 * x * (1.0 + jnp.tanh(c * (x + 0.044715 * x * x * x)))


# --------------------------- fully fused GPT kernel ---------------------------
def _gpt_kernel(x_ref, ln1g, ln1b, wq, bq, wk, bk, wv, bv, wo, bo,
                ln2g, ln2b, w1, b1, w2, b2,
                lnfg, lnfb, lmw, lmb,
                out_ref, x_vmem, *, n_head):
    """One grid step = (batch element b, layer l). x stays resident in VMEM."""
    l = pl.program_id(1)

    @pl.when(l == 0)
    def _():
        x_vmem[...] = x_ref[0].astype(jnp.float32)

    x = x_vmem[...]                              # (T, D) f32 residual stream
    T, D = x.shape
    H = n_head

    # ---- attention sub-block: x = x + OutProj(CausalMHA(LN1(x))) ----
    h = _ln(x, ln1g[0], ln1b[0])                 # (T, D) f32
    hb = jnp.broadcast_to(h.astype(MATMUL_DTYPE)[None], (H, T, D))

    # Head-major projections (1/sqrt(dh) already folded into wq/bq at host).
    q = jnp.einsum('htd,hde->hte', hb, wq[0],
                   preferred_element_type=jnp.float32) + bq[0]     # (H, T, dh)
    k = jnp.einsum('htd,hde->hte', hb, wk[0],
                   preferred_element_type=jnp.float32) + bk[0]
    v = jnp.einsum('htd,hde->hte', hb, wv[0],
                   preferred_element_type=jnp.float32) + bv[0]

    row = jax.lax.broadcasted_iota(jnp.int32, (T, T), 0)
    col = jax.lax.broadcasted_iota(jnp.int32, (T, T), 1)
    causal = (col <= row)[None]                  # (1, T, T)

    s = jnp.einsum('hqd,hkd->hqk', q.astype(MATMUL_DTYPE), k.astype(MATMUL_DTYPE),
                   preferred_element_type=jnp.float32)             # (H, T, T)
    s = jnp.where(causal, s, jnp.float32(-1e30))
    s = s - jnp.max(s, axis=-1, keepdims=True)
    p = jnp.exp(s)
    p = p * pl.reciprocal(jnp.sum(p, axis=-1, keepdims=True), approx=True)

    ctx = jnp.einsum('hqk,hkd->hqd', p.astype(MATMUL_DTYPE), v.astype(MATMUL_DTYPE),
                     preferred_element_type=jnp.float32)           # (H, T, dh)
    # concat(heads) @ Wo  ==  sum_h head_h @ Wo[h*dh:(h+1)*dh, :]
    proj = jnp.einsum('htd,hde->hte', ctx.astype(MATMUL_DTYPE), wo[0],
                      preferred_element_type=jnp.float32)          # (H, T, D)
    x = x + jnp.sum(proj, axis=0) + bo[0]

    # ---- MLP sub-block: x = x + W2 @ GELU(W1 @ LN2(x)) ----
    h2 = _ln(x, ln2g[0], ln2b[0])
    m = _gelu(jnp.dot(h2.astype(MATMUL_DTYPE), w1[0],
                      preferred_element_type=jnp.float32) + b1[0])
    m = jnp.dot(m.astype(MATMUL_DTYPE), w2[0],
                preferred_element_type=jnp.float32) + b2[0]
    x = x + m

    x_vmem[...] = x

    # ---- final LN + lm_head on the last layer, lane-dense logits store ----
    @pl.when(l == pl.num_programs(1) - 1)
    def _():
        hf = _ln(x, lnfg[...], lnfb[...])
        out_ref[0] = (jnp.dot(hf.astype(MATMUL_DTYPE), lmw[...],
                              preferred_element_type=jnp.float32)
                      + lmb[...]).astype(out_ref.dtype)


def gpt_pallas(params, x_emb):
    """x_emb: (B, T, D) -> padded logits (B, T, Vp). One pallas_call total."""
    B, T, D = x_emb.shape
    L = params["wq"].shape[0]
    Vp = params["lm_w"].shape[1]

    def wspec(arr):   # per-layer stacked weights: block follows the l axis
        nd = arr.ndim
        return pl.BlockSpec((1,) + arr.shape[1:],
                            lambda b, l, nd=nd: (l,) + (0,) * (nd - 1))

    def cspec(arr):   # layer-invariant (final head) weights
        nd = arr.ndim
        return pl.BlockSpec(arr.shape, lambda b, l, nd=nd: (0,) * nd)

    p = params
    return pl.pallas_call(
        functools.partial(_gpt_kernel, n_head=N_HEAD),
        grid=(B, L),
        out_shape=jax.ShapeDtypeStruct((B, T, Vp), jnp.float32),
        in_specs=[
            pl.BlockSpec((1, T, D), lambda b, l: (b, 0, 0)),       # embeddings
            wspec(p["ln1_g"]), wspec(p["ln1_b"]),
            wspec(p["wq"]), wspec(p["bq"]),
            wspec(p["wk"]), wspec(p["bk"]),
            wspec(p["wv"]), wspec(p["bv"]),
            wspec(p["wo"]), wspec(p["bo"]),
            wspec(p["ln2_g"]), wspec(p["ln2_b"]),
            wspec(p["w1"]), wspec(p["b1"]),
            wspec(p["w2"]), wspec(p["b2"]),
            cspec(p["lnf_g"]), cspec(p["lnf_b"]),
            cspec(p["lm_w"]), cspec(p["lm_b"]),
        ],
        out_specs=pl.BlockSpec((1, T, Vp), lambda b, l: (b, 0, 0)),
        scratch_shapes=[pltpu.VMEM((T, D), jnp.float32)],
        compiler_params=pltpu.CompilerParams(
            dimension_semantics=("parallel", "arbitrary")),
    )(x_emb,
      p["ln1_g"], p["ln1_b"],
      p["wq"], p["bq"], p["wk"], p["bk"], p["wv"], p["bv"], p["wo"], p["bo"],
      p["ln2_g"], p["ln2_b"], p["w1"], p["b1"], p["w2"], p["b2"],
      p["lnf_g"], p["lnf_b"], p["lm_w"], p["lm_b"])


def gpt_forward(params, idx):
    B, T = idx.shape
    # Embedding gathers are parameter glue; kept in plain JAX.
    x = params["wte"][idx] + params["wpe"][jnp.arange(T)]          # (B, T, D)
    logits_padded = gpt_pallas(params, x)                          # (B, T, Vp)
    return logits_padded[..., :VOCAB]


# ------------------- parameters: dense (f32) + kernel layout ------------------
def init_dense_params(key):
    """PyTorch-layout f32 parameters (used by the pure-JAX reference)."""
    D, H, L, V, T = N_EMBED, N_HEAD, N_LAYER, VOCAB, SEQ_LEN
    ks = iter(jax.random.split(key, 12))
    nrm = lambda shape: 0.02 * jax.random.normal(next(ks), shape, jnp.float32)
    return {
        "wte": nrm((V, D)), "wpe": nrm((T, D)),
        "ln1_g": jnp.ones((L, D)), "ln1_b": jnp.zeros((L, D)),
        "wq": nrm((L, D, D)), "bq": jnp.zeros((L, D)),
        "wk": nrm((L, D, D)), "bk": jnp.zeros((L, D)),
        "wv": nrm((L, D, D)), "bv": jnp.zeros((L, D)),
        "wo": nrm((L, D, D)), "bo": jnp.zeros((L, D)),
        "ln2_g": jnp.ones((L, D)), "ln2_b": jnp.zeros((L, D)),
        "w1": nrm((L, D, 4 * D)), "b1": jnp.zeros((L, 4 * D)),
        "w2": nrm((L, 4 * D, D)), "b2": jnp.zeros((L, D)),
        "lnf_g": jnp.ones((D,)), "lnf_b": jnp.zeros((D,)),
        "lm_w": nrm((D, V)), "lm_b": jnp.zeros((V,)),
    }


def to_kernel_params(p):
    """Host-time layout transform: head-major QKV/out-proj, bf16 weights,
    1/sqrt(dh) folded into the Q projection, vocab padded to a lane multiple."""
    D, H, L, V = N_EMBED, N_HEAD, N_LAYER, VOCAB
    dh = D // H
    Vp = ((V + 127) // 128) * 128
    scale = 1.0 / math.sqrt(dh)
    bf16 = lambda a: a.astype(jnp.bfloat16)

    def head_major_w(w):   # (L, D, H*dh) -> (L, H, D, dh)
        return w.reshape(L, D, H, dh).transpose(0, 2, 1, 3)

    def head_major_b(b):   # (L, H*dh) -> (L, H, 1, dh)
        return b.reshape(L, H, 1, dh)

    return {
        "wte": p["wte"], "wpe": p["wpe"],
        "ln1_g": p["ln1_g"].reshape(L, 1, D), "ln1_b": p["ln1_b"].reshape(L, 1, D),
        "wq": bf16(head_major_w(p["wq"]) * scale),        # scale folded in
        "bq": head_major_b(p["bq"]) * scale,              # (and into the bias)
        "wk": bf16(head_major_w(p["wk"])), "bk": head_major_b(p["bk"]),
        "wv": bf16(head_major_w(p["wv"])), "bv": head_major_b(p["bv"]),
        "wo": bf16(p["wo"].reshape(L, H, dh, D)),         # Wo rows split by head
        "bo": p["bo"].reshape(L, 1, D),
        "ln2_g": p["ln2_g"].reshape(L, 1, D), "ln2_b": p["ln2_b"].reshape(L, 1, D),
        "w1": bf16(p["w1"]), "b1": p["b1"].reshape(L, 1, 4 * D),
        "w2": bf16(p["w2"]), "b2": p["b2"].reshape(L, 1, D),
        "lnf_g": p["lnf_g"].reshape(1, D), "lnf_b": p["lnf_b"].reshape(1, D),
        "lm_w": bf16(jnp.pad(p["lm_w"], ((0, 0), (0, Vp - V)))),   # zero-pad vocab
        "lm_b": jnp.pad(p["lm_b"], (0, Vp - V)).reshape(1, Vp),
    }


# ---------------------------- pure-JAX f32 reference --------------------------
def _ln_ref(x, g, b):
    mu = x.mean(-1, keepdims=True)
    var = ((x - mu) ** 2).mean(-1, keepdims=True)
    return (x - mu) / jnp.sqrt(var + LN_EPS) * g + b


def gpt_reference(p, idx):
    B, T = idx.shape
    D, H = N_EMBED, N_HEAD
    dh = D // H
    x = p["wte"][idx] + p["wpe"][jnp.arange(T)]
    mask = jnp.tril(jnp.ones((T, T), dtype=bool))
    for l in range(N_LAYER):
        h = _ln_ref(x, p["ln1_g"][l], p["ln1_b"][l])
        q = (h @ p["wq"][l] + p["bq"][l]).reshape(B, T, H, dh).transpose(0, 2, 1, 3)
        k = (h @ p["wk"][l] + p["bk"][l]).reshape(B, T, H, dh).transpose(0, 2, 1, 3)
        v = (h @ p["wv"][l] + p["bv"][l]).reshape(B, T, H, dh).transpose(0, 2, 1, 3)
        s = (q @ k.transpose(0, 1, 3, 2)) / math.sqrt(dh)
        s = jnp.where(mask, s, -1e30)
        pa = jax.nn.softmax(s, axis=-1)
        ctx = (pa @ v).transpose(0, 2, 1, 3).reshape(B, T, D)
        x = x + ctx @ p["wo"][l] + p["bo"][l]
        h2 = _ln_ref(x, p["ln2_g"][l], p["ln2_b"][l])
        m = _gelu(h2 @ p["w1"][l] + p["b1"][l]) @ p["w2"][l] + p["b2"][l]
        x = x + m
    x = _ln_ref(x, p["lnf_g"], p["lnf_b"])
    return x @ p["lm_w"] + p["lm_b"]


# ------------------------------------ main -------------------------------------
if __name__ == "__main__":
    key = jax.random.PRNGKey(0)
    pkey, ikey = jax.random.split(key)
    dense = init_dense_params(pkey)
    kparams = to_kernel_params(dense)

    B, T = 2, SEQ_LEN
    idx = jax.random.randint(ikey, (B, T), 0, VOCAB, dtype=jnp.int32)

    logits = jax.jit(gpt_forward)(kparams, idx)
    logits = jax.block_until_ready(logits)
    assert logits.shape == (B, T, VOCAB)
    assert bool(jnp.all(jnp.isfinite(logits)))

    ref = gpt_reference(dense, idx)
    err = float(jnp.max(jnp.abs(logits - ref)))
    # bf16 matmul operands + approx reciprocal => small deviation vs f32 ref.
    assert err < 2e-2, f"max abs error vs f32 reference: {err}"

    print("KERNEL_OK")
</pallas_src>

<mosaic_0001>
module attributes {stable_mosaic.version = 11 : i64} {
  func.func @_gpt_kernel(%arg0: i32, %arg1: i32, %arg2: memref<1x8x32xf32, #tpu.memory_space<vmem>>, %arg3: memref<1x1x32xf32, #tpu.memory_space<vmem>>, %arg4: memref<1x1x32xf32, #tpu.memory_space<vmem>>, %arg5: memref<1x4x32x8xbf16, #tpu.memory_space<vmem>>, %arg6: memref<1x4x1x8xf32, #tpu.memory_space<vmem>>, %arg7: memref<1x4x32x8xbf16, #tpu.memory_space<vmem>>, %arg8: memref<1x4x1x8xf32, #tpu.memory_space<vmem>>, %arg9: memref<1x4x32x8xbf16, #tpu.memory_space<vmem>>, %arg10: memref<1x4x1x8xf32, #tpu.memory_space<vmem>>, %arg11: memref<1x4x8x32xbf16, #tpu.memory_space<vmem>>, %arg12: memref<1x1x32xf32, #tpu.memory_space<vmem>>, %arg13: memref<1x1x32xf32, #tpu.memory_space<vmem>>, %arg14: memref<1x1x32xf32, #tpu.memory_space<vmem>>, %arg15: memref<1x32x128xbf16, #tpu.memory_space<vmem>>, %arg16: memref<1x1x128xf32, #tpu.memory_space<vmem>>, %arg17: memref<1x128x32xbf16, #tpu.memory_space<vmem>>, %arg18: memref<1x1x32xf32, #tpu.memory_space<vmem>>, %arg19: memref<1x32xf32, #tpu.memory_space<vmem>>, %arg20: memref<1x32xf32, #tpu.memory_space<vmem>>, %arg21: memref<32x128xbf16, #tpu.memory_space<vmem>>, %arg22: memref<1x128xf32, #tpu.memory_space<vmem>>, %arg23: memref<1x8x128xf32, #tpu.memory_space<vmem>>, %arg24: memref<8x32xf32, #tpu.memory_space<vmem>>) attributes {dimension_semantics = [#tpu.dimension_semantics<parallel>, #tpu.dimension_semantics<arbitrary>], iteration_bounds = array<i64: 2, 2>, scalar_prefetch = 0 : i64, scratch_operands = 1 : i64, tpu.core_type = #tpu.core_type<tc>, window_params = [{transform_indices = @transform_0, window_bounds = array<i64: 1, 8, 32>}, {transform_indices = @transform_1, window_bounds = array<i64: 1, 1, 32>}, {transform_indices = @transform_2, window_bounds = array<i64: 1, 1, 32>}, {transform_indices = @transform_3, window_bounds = array<i64: 1, 4, 32, 8>}, {transform_indices = @transform_4, window_bounds = array<i64: 1, 4, 1, 8>}, {transform_indices = @transform_5, window_bounds = array<i64: 1, 4, 32, 8>}, {transform_indices = @transform_6, window_bounds = array<i64: 1, 4, 1, 8>}, {transform_indices = @transform_7, window_bounds = array<i64: 1, 4, 32, 8>}, {transform_indices = @transform_8, window_bounds = array<i64: 1, 4, 1, 8>}, {transform_indices = @transform_9, window_bounds = array<i64: 1, 4, 8, 32>}, {transform_indices = @transform_10, window_bounds = array<i64: 1, 1, 32>}, {transform_indices = @transform_11, window_bounds = array<i64: 1, 1, 32>}, {transform_indices = @transform_12, window_bounds = array<i64: 1, 1, 32>}, {transform_indices = @transform_13, window_bounds = array<i64: 1, 32, 128>}, {transform_indices = @transform_14, window_bounds = array<i64: 1, 1, 128>}, {transform_indices = @transform_15, window_bounds = array<i64: 1, 128, 32>}, {transform_indices = @transform_16, window_bounds = array<i64: 1, 1, 32>}, {pipeline_mode = #tpu.pipeline_mode<synchronous>, transform_indices = @transform_17, window_bounds = array<i64: 1, 32>}, {pipeline_mode = #tpu.pipeline_mode<synchronous>, transform_indices = @transform_18, window_bounds = array<i64: 1, 32>}, {pipeline_mode = #tpu.pipeline_mode<synchronous>, transform_indices = @transform_19, window_bounds = array<i64: 32, 128>}, {pipeline_mode = #tpu.pipeline_mode<synchronous>, transform_indices = @transform_20, window_bounds = array<i64: 1, 128>}, {transform_indices = @transform_21, window_bounds = array<i64: 1, 8, 128>}]} {
    %c0_i32 = arith.constant 0 : i32
    %0 = arith.cmpi eq, %arg1, %c0_i32 : i32
    %1 = arith.extui %0 : i1 to i32
    %c0_i32_0 = arith.constant 0 : i32
    %2 = arith.cmpi ne, %1, %c0_i32_0 : i32
    scf.if %2 {
      %c0_85 = arith.constant 0 : index
      %c0_86 = arith.constant 0 : index
      %c0_87 = arith.constant 0 : index
      %145 = vector.load %arg2[%c0_85, %c0_86, %c0_87] : memref<1x8x32xf32, #tpu.memory_space<vmem>>, vector<1x8x32xf32>
      %146 = vector.shape_cast %145 : vector<1x8x32xf32> to vector<8x32xf32>
      %c0_88 = arith.constant 0 : index
      %c0_89 = arith.constant 0 : index
      %147 = vector.load %arg24[%c0_88, %c0_89] : memref<8x32xf32, #tpu.memory_space<vmem>>, vector<8x32xf32>
      tpu.vector_store %arg24[%c0_88, %c0_89], %146 {strides = array<i32>} : memref<8x32xf32, #tpu.memory_space<vmem>>, vector<8x32xf32>,
    } else {
    }
    %c0 = arith.constant 0 : index
    %c0_1 = arith.constant 0 : index
    %3 = vector.load %arg24[%c0, %c0_1] : memref<8x32xf32, #tpu.memory_space<vmem>>, vector<8x32xf32>
    %c0_2 = arith.constant 0 : index
    %c0_3 = arith.constant 0 : index
    %c0_4 = arith.constant 0 : index
    %4 = vector.load %arg3[%c0_2, %c0_3, %c0_4] : memref<1x1x32xf32, #tpu.memory_space<vmem>>, vector<1x1x32xf32>
    %5 = vector.shape_cast %4 : vector<1x1x32xf32> to vector<1x32xf32>
    %c0_5 = arith.constant 0 : index
    %c0_6 = arith.constant 0 : index
    %c0_7 = arith.constant 0 : index
    %6 = vector.load %arg4[%c0_5, %c0_6, %c0_7] : memref<1x1x32xf32, #tpu.memory_space<vmem>>, vector<1x1x32xf32>
    %7 = vector.shape_cast %6 : vector<1x1x32xf32> to vector<1x32xf32>
    %cst = arith.constant dense<0.000000e+00> : vector<8xf32>
    %8 = vector.multi_reduction <add>, %3, %cst [1] : vector<8x32xf32> to vector<8xf32>
    %9 = vector.shape_cast %8 : vector<8xf32> to vector<8x1xf32>
    %cst_8 = arith.constant 3.200000e+01 : f32
    %10 = vector.broadcast %cst_8 : f32 to vector<8x1xf32>
    %11 = arith.divf %9, %10 : vector<8x1xf32>
    %12 = vector.broadcast %11 : vector<8x1xf32> to vector<8x32xf32>
    %13 = arith.subf %3, %12 : vector<8x32xf32>
    %14 = arith.mulf %13, %13 : vector<8x32xf32>
    %cst_9 = arith.constant dense<0.000000e+00> : vector<8xf32>
    %15 = vector.multi_reduction <add>, %14, %cst_9 [1] : vector<8x32xf32> to vector<8xf32>
    %16 = vector.shape_cast %15 : vector<8xf32> to vector<8x1xf32>
    %cst_10 = arith.constant 3.200000e+01 : f32
    %17 = vector.broadcast %cst_10 : f32 to vector<8x1xf32>
    %18 = arith.divf %16, %17 : vector<8x1xf32>
    %cst_11 = arith.constant 9.99999974E-6 : f32
    %19 = vector.broadcast %cst_11 : f32 to vector<8x1xf32>
    %20 = arith.addf %18, %19 : vector<8x1xf32>
    %21 = math.rsqrt %20 : vector<8x1xf32>
    %22 = vector.broadcast %21 : vector<8x1xf32> to vector<8x32xf32>
    %23 = arith.mulf %13, %22 : vector<8x32xf32>
    %24 = vector.broadcast %5 : vector<1x32xf32> to vector<8x32xf32>
    %25 = arith.mulf %23, %24 : vector<8x32xf32>
    %26 = vector.broadcast %7 : vector<1x32xf32> to vector<8x32xf32>
    %27 = arith.addf %25, %26 : vector<8x32xf32>
    %28 = arith.truncf %27 : vector<8x32xf32> to vector<8x32xbf16>
    %29 = vector.shape_cast %28 : vector<8x32xbf16> to vector<1x8x32xbf16>
    %30 = vector.shape_cast %29 : vector<1x8x32xbf16> to vector<1x8x32xbf16>
    %31 = vector.broadcast %30 : vector<1x8x32xbf16> to vector<4x8x32xbf16>
    %c0_12 = arith.constant 0 : index
    %c0_13 = arith.constant 0 : index
    %c0_14 = arith.constant 0 : index
    %c0_15 = arith.constant 0 : index
    %32 = vector.load %arg5[%c0_12, %c0_13, %c0_14, %c0_15] : memref<1x4x32x8xbf16, #tpu.memory_space<vmem>>, vector<1x4x32x8xbf16>
    %33 = vector.shape_cast %32 : vector<1x4x32x8xbf16> to vector<4x32x8xbf16>
    "tpu.trace_start"() <{level = 10 : i32, message = "htd,hde->hte"}> : () -> ()
    %cst_16 = arith.constant dense<0.000000e+00> : vector<4x8x8xf32>
    %34 = tpu.matmul %31, %33, %cst_16 {dimension_numbers = #tpu.dot_dimension_numbers<[2], [1], [1], [2], [0, 0, 0, 1, 1, 2], [0], [0]>} : vector<4x8x32xbf16>, vector<4x32x8xbf16>, vector<4x8x8xf32> -> vector<4x8x8xf32>
    "tpu.trace_stop"() : () -> ()
    %c0_17 = arith.constant 0 : index
    %c0_18 = arith.constant 0 : index
    %c0_19 = arith.constant 0 : index
    %c0_20 = arith.constant 0 : index
    %35 = vector.load %arg6[%c0_17, %c0_18, %c0_19, %c0_20] : memref<1x4x1x8xf32, #tpu.memory_space<vmem>>, vector<1x4x1x8xf32>
    %36 = vector.shape_cast %35 : vector<1x4x1x8xf32> to vector<4x1x8xf32>
    %37 = vector.broadcast %36 : vector<4x1x8xf32> to vector<4x8x8xf32>
    %38 = arith.addf %34, %37 : vector<4x8x8xf32>
    %c0_21 = arith.constant 0 : index
    %c0_22 = arith.constant 0 : index
    %c0_23 = arith.constant 0 : index
    %c0_24 = arith.constant 0 : index
    %39 = vector.load %arg7[%c0_21, %c0_22, %c0_23, %c0_24] : memref<1x4x32x8xbf16, #tpu.memory_space<vmem>>, vector<1x4x32x8xbf16>
    %40 = vector.shape_cast %39 : vector<1x4x32x8xbf16> to vector<4x32x8xbf16>
    "tpu.trace_start"() <{level = 10 : i32, message = "htd,hde->hte"}> : () -> ()
    %cst_25 = arith.constant dense<0.000000e+00> : vector<4x8x8xf32>
    %41 = tpu.matmul %31, %40, %cst_25 {dimension_numbers = #tpu.dot_dimension_numbers<[2], [1], [1], [2], [0, 0, 0, 1, 1, 2], [0], [0]>} : vector<4x8x32xbf16>, vector<4x32x8xbf16>, vector<4x8x8xf32> -> vector<4x8x8xf32>
    "tpu.trace_stop"() : () -> ()
    %c0_26 = arith.constant 0 : index
    %c0_27 = arith.constant 0 : index
    %c0_28 = arith.constant 0 : index
    %c0_29 = arith.constant 0 : index
    %42 = vector.load %arg8[%c0_26, %c0_27, %c0_28, %c0_29] : memref<1x4x1x8xf32, #tpu.memory_space<vmem>>, vector<1x4x1x8xf32>
    %43 = vector.shape_cast %42 : vector<1x4x1x8xf32> to vector<4x1x8xf32>
    %44 = vector.broadcast %43 : vector<4x1x8xf32> to vector<4x8x8xf32>
    %45 = arith.addf %41, %44 : vector<4x8x8xf32>
    %c0_30 = arith.constant 0 : index
    %c0_31 = arith.constant 0 : index
    %c0_32 = arith.constant 0 : index
    %c0_33 = arith.constant 0 : index
    %46 = vector.load %arg9[%c0_30, %c0_31, %c0_32, %c0_33] : memref<1x4x32x8xbf16, #tpu.memory_space<vmem>>, vector<1x4x32x8xbf16>
    %47 = vector.shape_cast %46 : vector<1x4x32x8xbf16> to vector<4x32x8xbf16>
    "tpu.trace_start"() <{level = 10 : i32, message = "htd,hde->hte"}> : () -> ()
    %cst_34 = arith.constant dense<0.000000e+00> : vector<4x8x8xf32>
    %48 = tpu.matmul %31, %47, %cst_34 {dimension_numbers = #tpu.dot_dimension_numbers<[2], [1], [1], [2], [0, 0, 0, 1, 1, 2], [0], [0]>} : vector<4x8x32xbf16>, vector<4x32x8xbf16>, vector<4x8x8xf32> -> vector<4x8x8xf32>
    "tpu.trace_stop"() : () -> ()
    %c0_35 = arith.constant 0 : index
    %c0_36 = arith.constant 0 : index
    %c0_37 = arith.constant 0 : index
    %c0_38 = arith.constant 0 : index
    %49 = vector.load %arg10[%c0_35, %c0_36, %c0_37, %c0_38] : memref<1x4x1x8xf32, #tpu.memory_space<vmem>>, vector<1x4x1x8xf32>
    %50 = vector.shape_cast %49 : vector<1x4x1x8xf32> to vector<4x1x8xf32>
    %51 = vector.broadcast %50 : vector<4x1x8xf32> to vector<4x8x8xf32>
    %52 = arith.addf %48, %51 : vector<4x8x8xf32>
    %53 = tpu.iota {dimensions = array<i32: 0>} : vector<8x8xi32>
    %54 = tpu.iota {dimensions = array<i32: 1>} : vector<8x8xi32>
    %55 = arith.cmpi sle, %54, %53 : vector<8x8xi32>
    %56 = vector.shape_cast %55 : vector<8x8xi1> to vector<1x8x8xi1>
    %57 = arith.truncf %38 : vector<4x8x8xf32> to vector<4x8x8xbf16>
    %58 = arith.truncf %45 : vector<4x8x8xf32> to vector<4x8x8xbf16>
    "tpu.trace_start"() <{level = 10 : i32, message = "hqd,hkd->hqk"}> : () -> ()
    %cst_39 = arith.constant dense<0.000000e+00> : vector<4x8x8xf32>
    %59 = tpu.matmul %57, %58, %cst_39 {dimension_numbers = #tpu.dot_dimension_numbers<[2], [2], [1], [1], [0, 0, 0, 1, 1, 1], [0], [0]>} : vector<4x8x8xbf16>, vector<4x8x8xbf16>, vector<4x8x8xf32> -> vector<4x8x8xf32>
    %cst_40 = arith.constant -1.000000e+30 : f32
    "tpu.trace_stop"() : () -> ()
    %60 = vector.shape_cast %56 : vector<1x8x8xi1> to vector<1x8x8xi1>
    %61 = vector.broadcast %60 : vector<1x8x8xi1> to vector<4x8x8xi1>
    %62 = vector.broadcast %cst_40 : f32 to vector<4x8x8xf32>
    %63 = arith.select %61, %59, %62 : vector<4x8x8xi1>, vector<4x8x8xf32>
    %cst_41 = arith.constant dense<0xFF800000> : vector<4x8xf32>
    %64 = vector.multi_reduction <maximumf>, %63, %cst_41 [2] : vector<4x8x8xf32> to vector<4x8xf32>
    %65 = vector.shape_cast %64 : vector<4x8xf32> to vector<4x8x1xf32>
    %66 = vector.broadcast %65 : vector<4x8x1xf32> to vector<4x8x8xf32>
    %67 = arith.subf %63, %66 : vector<4x8x8xf32>
    %68 = math.exp %67 : vector<4x8x8xf32>
    %cst_42 = arith.constant dense<0.000000e+00> : vector<4x8xf32>
    %69 = vector.multi_reduction <add>, %68, %cst_42 [2] : vector<4x8x8xf32> to vector<4x8xf32>
    %70 = vector.shape_cast %69 : vector<4x8xf32> to vector<4x8x1xf32>
    %71 = tpu.reciprocal %70 {approx = true} : vector<4x8x1xf32> -> vector<4x8x1xf32>
    %72 = vector.broadcast %71 : vector<4x8x1xf32> to vector<4x8x8xf32>
    %73 = arith.mulf %68, %72 : vector<4x8x8xf32>
    %74 = arith.truncf %73 : vector<4x8x8xf32> to vector<4x8x8xbf16>
    %75 = arith.truncf %52 : vector<4x8x8xf32> to vector<4x8x8xbf16>
    "tpu.trace_start"() <{level = 10 : i32, message = "hqk,hkd->hqd"}> : () -> ()
    %cst_43 = arith.constant dense<0.000000e+00> : vector<4x8x8xf32>
    %76 = tpu.matmul %74, %75, %cst_43 {dimension_numbers = #tpu.dot_dimension_numbers<[2], [1], [1], [2], [0, 0, 0, 1, 1, 2], [0], [0]>} : vector<4x8x8xbf16>, vector<4x8x8xbf16>, vector<4x8x8xf32> -> vector<4x8x8xf32>
    "tpu.trace_stop"() : () -> ()
    %77 = arith.truncf %76 : vector<4x8x8xf32> to vector<4x8x8xbf16>
    %c0_44 = arith.constant 0 : index
    %c0_45 = arith.constant 0 : index
    %c0_46 = arith.constant 0 : index
    %c0_47 = arith.constant 0 : index
    %78 = vector.load %arg11[%c0_44, %c0_45, %c0_46, %c0_47] : memref<1x4x8x32xbf16, #tpu.memory_space<vmem>>, vector<1x4x8x32xbf16>
    %79 = vector.shape_cast %78 : vector<1x4x8x32xbf16> to vector<4x8x32xbf16>
    "tpu.trace_start"() <{level = 10 : i32, message = "htd,hde->hte"}> : () -> ()
    %cst_48 = arith.constant dense<0.000000e+00> : vector<4x8x32xf32>
    %80 = tpu.matmul %77, %79, %cst_48 {dimension_numbers = #tpu.dot_dimension_numbers<[2], [1], [1], [2], [0, 0, 0, 1, 1, 2], [0], [0]>} : vector<4x8x8xbf16>, vector<4x8x32xbf16>, vector<4x8x32xf32> -> vector<4x8x32xf32>
    "tpu.trace_stop"() : () -> ()
    %cst_49 = arith.constant dense<0.000000e+00> : vector<8x32xf32>
    %81 = vector.multi_reduction <add>, %80, %cst_49 [0] : vector<4x8x32xf32> to vector<8x32xf32>
    %82 = arith.addf %3, %81 : vector<8x32xf32>
    %c0_50 = arith.constant 0 : index
    %c0_51 = arith.constant 0 : index
    %c0_52 = arith.constant 0 : index
    %83 = vector.load %arg12[%c0_50, %c0_51, %c0_52] : memref<1x1x32xf32, #tpu.memory_space<vmem>>, vector<1x1x32xf32>
    %84 = vector.shape_cast %83 : vector<1x1x32xf32> to vector<1x32xf32>
    %85 = vector.broadcast %84 : vector<1x32xf32> to vector<8x32xf32>
    %86 = arith.addf %82, %85 : vector<8x32xf32>
    %c0_53 = arith.constant 0 : index
    %c0_54 = arith.constant 0 : index
    %c0_55 = arith.constant 0 : index
    %87 = vector.load %arg13[%c0_53, %c0_54, %c0_55] : memref<1x1x32xf32, #tpu.memory_space<vmem>>, vector<1x1x32xf32>
    %88 = vector.shape_cast %87 : vector<1x1x32xf32> to vector<1x32xf32>
    %c0_56 = arith.constant 0 : index
    %c0_57 = arith.constant 0 : index
    %c0_58 = arith.constant 0 : index
    %89 = vector.load %arg14[%c0_56, %c0_57, %c0_58] : memref<1x1x32xf32, #tpu.memory_space<vmem>>, vector<1x1x32xf32>
    %90 = vector.shape_cast %89 : vector<1x1x32xf32> to vector<1x32xf32>
    %cst_59 = arith.constant dense<0.000000e+00> : vector<8xf32>
    %91 = vector.multi_reduction <add>, %86, %cst_59 [1] : vector<8x32xf32> to vector<8xf32>
    %92 = vector.shape_cast %91 : vector<8xf32> to vector<8x1xf32>
    %cst_60 = arith.constant 3.200000e+01 : f32
    %93 = vector.broadcast %cst_60 : f32 to vector<8x1xf32>
    %94 = arith.divf %92, %93 : vector<8x1xf32>
    %95 = vector.broadcast %94 : vector<8x1xf32> to vector<8x32xf32>
    %96 = arith.subf %86, %95 : vector<8x32xf32>
    %97 = arith.mulf %96, %96 : vector<8x32xf32>
    %cst_61 = arith.constant dense<0.000000e+00> : vector<8xf32>
    %98 = vector.multi_reduction <add>, %97, %cst_61 [1] : vector<8x32xf32> to vector<8xf32>
    %99 = vector.shape_cast %98 : vector<8xf32> to vector<8x1xf32>
    %cst_62 = arith.constant 3.200000e+01 : f32
    %100 = vector.broadcast %cst_62 : f32 to vector<8x1xf32>
    %101 = arith.divf %99, %100 : vector<8x1xf32>
    %cst_63 = arith.constant 9.99999974E-6 : f32
    %102 = vector.broadcast %cst_63 : f32 to vector<8x1xf32>
    %103 = arith.addf %101, %102 : vector<8x1xf32>
    %104 = math.rsqrt %103 : vector<8x1xf32>
    %105 = vector.broadcast %104 : vector<8x1xf32> to vector<8x32xf32>
    %106 = arith.mulf %96, %105 : vector<8x32xf32>
    %107 = vector.broadcast %88 : vector<1x32xf32> to vector<8x32xf32>
    %108 = arith.mulf %106, %107 : vector<8x32xf32>
    %109 = vector.broadcast %90 : vector<1x32xf32> to vector<8x32xf32>
    %110 = arith.addf %108, %109 : vector<8x32xf32>
    %111 = arith.truncf %110 : vector<8x32xf32> to vector<8x32xbf16>
    %c0_64 = arith.constant 0 : index
    %c0_65 = arith.constant 0 : index
    %c0_66 = arith.constant 0 : index
    %112 = vector.load %arg15[%c0_64, %c0_65, %c0_66] : memref<1x32x128xbf16, #tpu.memory_space<vmem>>, vector<1x32x128xbf16>
    %113 = vector.shape_cast %112 : vector<1x32x128xbf16> to vector<32x128xbf16>
    %cst_67 = arith.constant dense<0.000000e+00> : vector<8x128xf32>
    %114 = tpu.matmul %111, %113, %cst_67 {dimension_numbers = #tpu.dot_dimension_numbers<[1], [0], [0], [1], [0, 0, 1, 1], [], []>} : vector<8x32xbf16>, vector<32x128xbf16>, vector<8x128xf32> -> vector<8x128xf32>
    %c0_68 = arith.constant 0 : index
    %c0_69 = arith.constant 0 : index
    %c0_70 = arith.constant 0 : index
    %115 = vector.load %arg16[%c0_68, %c0_69, %c0_70] : memref<1x1x128xf32, #tpu.memory_space<vmem>>, vector<1x1x128xf32>
    %116 = vector.shape_cast %115 : vector<1x1x128xf32> to vector<1x128xf32>
    %117 = vector.broadcast %116 : vector<1x128xf32> to vector<8x128xf32>
    %118 = arith.addf %114, %117 : vector<8x128xf32>
    %cst_71 = arith.constant 5.000000e-01 : f32
    %119 = vector.broadcast %cst_71 : f32 to vector<8x128xf32>
    %120 = arith.mulf %119, %118 : vector<8x128xf32>
    %cst_72 = arith.constant 4.471500e-02 : f32
    %121 = vector.broadcast %cst_72 : f32 to vector<8x128xf32>
    %122 = arith.mulf %121, %118 : vector<8x128xf32>
    %123 = arith.mulf %122, %118 : vector<8x128xf32>
    %124 = arith.mulf %123, %118 : vector<8x128xf32>
    %125 = arith.addf %118, %124 : vector<8x128xf32>
    %cst_73 = arith.constant 0.797884583 : f32
    %126 = vector.broadcast %cst_73 : f32 to vector<8x128xf32>
    %127 = arith.mulf %126, %125 : vector<8x128xf32>
    %128 = math.tanh %127 : vector<8x128xf32>
    %cst_74 = arith.constant 1.000000e+00 : f32
    %129 = vector.broadcast %cst_74 : f32 to vector<8x128xf32>
    %130 = arith.addf %129, %128 : vector<8x128xf32>
    %131 = arith.mulf %120, %130 : vector<8x128xf32>
    %132 = arith.truncf %131 : vector<8x128xf32> to vector<8x128xbf16>
    %c0_75 = arith.constant 0 : index
    %c0_76 = arith.constant 0 : index
    %c0_77 = arith.constant 0 : index
    %133 = vector.load %arg17[%c0_75, %c0_76, %c0_77] : memref<1x128x32xbf16, #tpu.memory_space<vmem>>, vector<1x128x32xbf16>
    %134 = vector.shape_cast %133 : vector<1x128x32xbf16> to vector<128x32xbf16>
    %cst_78 = arith.constant dense<0.000000e+00> : vector<8x32xf32>
    %135 = tpu.matmul %132, %134, %cst_78 {dimension_numbers = #tpu.dot_dimension_numbers<[1], [0], [0], [1], [0, 0, 1, 1], [], []>} : vector<8x128xbf16>, vector<128x32xbf16>, vector<8x32xf32> -> vector<8x32xf32>
    %c0_79 = arith.constant 0 : index
    %c0_80 = arith.constant 0 : index
    %c0_81 = arith.constant 0 : index
    %136 = vector.load %arg18[%c0_79, %c0_80, %c0_81] : memref<1x1x32xf32, #tpu.memory_space<vmem>>, vector<1x1x32xf32>
    %137 = vector.shape_cast %136 : vector<1x1x32xf32> to vector<1x32xf32>
    %138 = vector.broadcast %137 : vector<1x32xf32> to vector<8x32xf32>
    %139 = arith.addf %135, %138 : vector<8x32xf32>
    %140 = arith.addf %86, %139 : vector<8x32xf32>
    %c0_82 = arith.constant 0 : index
    %c0_83 = arith.constant 0 : index
    %141 = vector.load %arg24[%c0_82, %c0_83] : memref<8x32xf32, #tpu.memory_space<vmem>>, vector<8x32xf32>
    tpu.vector_store %arg24[%c0_82, %c0_83], %140 {strides = array<i32>} : memref<8x32xf32, #tpu.memory_space<vmem>>, vector<8x32xf32>,
    %c1_i32 = arith.constant 1 : i32
    %142 = arith.cmpi eq, %arg1, %c1_i32 : i32
    %143 = arith.extui %142 : i1 to i32
    %c0_i32_84 = arith.constant 0 : i32
    %144 = arith.cmpi ne, %143, %c0_i32_84 : i32
    scf.if %144 {
      %c0_85 = arith.constant 0 : index
      %c0_86 = arith.constant 0 : index
      %145 = vector.load %arg19[%c0_85, %c0_86] : memref<1x32xf32, #tpu.memory_space<vmem>>, vector<1x32xf32>
      %c0_87 = arith.constant 0 : index
      %c0_88 = arith.constant 0 : index
      %146 = vector.load %arg20[%c0_87, %c0_88] : memref<1x32xf32, #tpu.memory_space<vmem>>, vector<1x32xf32>
      %cst_89 = arith.constant dense<0.000000e+00> : vector<8xf32>
      %147 = vector.multi_reduction <add>, %140, %cst_89 [1] : vector<8x32xf32> to vector<8xf32>
      %148 = vector.shape_cast %147 : vector<8xf32> to vector<8x1xf32>
      %cst_90 = arith.constant 3.200000e+01 : f32
      %149 = vector.broadcast %cst_90 : f32 to vector<8x1xf32>
      %150 = arith.divf %148, %149 : vector<8x1xf32>
      %151 = vector.broadcast %150 : vector<8x1xf32> to vector<8x32xf32>
      %152 = arith.subf %140, %151 : vector<8x32xf32>
      %153 = arith.mulf %152, %152 : vector<8x32xf32>
      %cst_91 = arith.constant dense<0.000000e+00> : vector<8xf32>
      %154 = vector.multi_reduction <add>, %153, %cst_91 [1] : vector<8x32xf32> to vector<8xf32>
      %155 = vector.shape_cast %154 : vector<8xf32> to vector<8x1xf32>
      %cst_92 = arith.constant 3.200000e+01 : f32
      %156 = vector.broadcast %cst_92 : f32 to vector<8x1xf32>
      %157 = arith.divf %155, %156 : vector<8x1xf32>
      %cst_93 = arith.constant 9.99999974E-6 : f32
      %158 = vector.broadcast %cst_93 : f32 to vector<8x1xf32>
      %159 = arith.addf %157, %158 : vector<8x1xf32>
      %160 = math.rsqrt %159 : vector<8x1xf32>
      %161 = vector.broadcast %160 : vector<8x1xf32> to vector<8x32xf32>
      %162 = arith.mulf %152, %161 : vector<8x32xf32>
      %163 = vector.broadcast %145 : vector<1x32xf32> to vector<8x32xf32>
      %164 = arith.mulf %162, %163 : vector<8x32xf32>
      %165 = vector.broadcast %146 : vector<1x32xf32> to vector<8x32xf32>
      %166 = arith.addf %164, %165 : vector<8x32xf32>
      %167 = arith.truncf %166 : vector<8x32xf32> to vector<8x32xbf16>
      %c0_94 = arith.constant 0 : index
      %c0_95 = arith.constant 0 : index
      %168 = vector.load %arg21[%c0_94, %c0_95] : memref<32x128xbf16, #tpu.memory_space<vmem>>, vector<32x128xbf16>
      %cst_96 = arith.constant dense<0.000000e+00> : vector<8x128xf32>
      %169 = tpu.matmul %167, %168, %cst_96 {dimension_numbers = #tpu.dot_dimension_numbers<[1], [0], [0], [1], [0, 0, 1, 1], [], []>} : vector<8x32xbf16>, vector<32x128xbf16>, vector<8x128xf32> -> vector<8x128xf32>
      %c0_97 = arith.constant 0 : index
      %c0_98 = arith.constant 0 : index
      %170 = vector.load %arg22[%c0_97, %c0_98] : memref<1x128xf32, #tpu.memory_space<vmem>>, vector<1x128xf32>
      %171 = vector.broadcast %170 : vector<1x128xf32> to vector<8x128xf32>
      %172 = arith.addf %169, %171 : vector<8x128xf32>
      %c0_99 = arith.constant 0 : index
      %c0_100 = arith.constant 0 : index
      %c0_101 = arith.constant 0 : index
      %173 = vector.load %arg23[%c0_99, %c0_100, %c0_101] : memref<1x8x128xf32, #tpu.memory_space<vmem>>, vector<1x8x128xf32>
      %174 = vector.shape_cast %173 : vector<1x8x128xf32> to vector<8x128xf32>
      %175 = vector.shape_cast %172 : vector<8x128xf32> to vector<1x8x128xf32>
      tpu.vector_store %arg23[%c0_99, %c0_100, %c0_101], %175 {strides = array<i32>} : memref<1x8x128xf32, #tpu.memory_space<vmem>>, vector<1x8x128xf32>,
    } else {
    }
    return
  }
  func.func @transform_0(%arg0: i32, %arg1: i32) -> (i32, i32, i32) {
    %c0_i32 = arith.constant 0 : i32
    %c0_i32_0 = arith.constant 0 : i32
    %c0_i32_1 = arith.constant 0 : i32
    return %arg0, %c0_i32, %c0_i32_0 : i32, i32, i32
  }
  func.func @transform_1(%arg0: i32, %arg1: i32) -> (i32, i32, i32) {
    %c0_i32 = arith.constant 0 : i32
    %c0_i32_0 = arith.constant 0 : i32
    %c0_i32_1 = arith.constant 0 : i32
    return %arg1, %c0_i32, %c0_i32_0 : i32, i32, i32
  }
  func.func @transform_2(%arg0: i32, %arg1: i32) -> (i32, i32, i32) {
    %c0_i32 = arith.constant 0 : i32
    %c0_i32_0 = arith.constant 0 : i32
    %c0_i32_1 = arith.constant 0 : i32
    return %arg1, %c0_i32, %c0_i32_0 : i32, i32, i32
  }
  func.func @transform_3(%arg0: i32, %arg1: i32) -> (i32, i32, i32, i32) {
    %c0_i32 = arith.constant 0 : i32
    %c0_i32_0 = arith.constant 0 : i32
    %c0_i32_1 = arith.constant 0 : i32
    %c0_i32_2 = arith.constant 0 : i32
    return %arg1, %c0_i32, %c0_i32_0, %c0_i32_1 : i32, i32, i32, i32
  }
  func.func @transform_4(%arg0: i32, %arg1: i32) -> (i32, i32, i32, i32) {
    %c0_i32 = arith.constant 0 : i32
    %c0_i32_0 = arith.constant 0 : i32
    %c0_i32_1 = arith.constant 0 : i32
    %c0_i32_2 = arith.constant 0 : i32
    return %arg1, %c0_i32, %c0_i32_0, %c0_i32_1 : i32, i32, i32, i32
  }
  func.func @transform_5(%arg0: i32, %arg1: i32) -> (i32, i32, i32, i32) {
    %c0_i32 = arith.constant 0 : i32
    %c0_i32_0 = arith.constant 0 : i32
    %c0_i32_1 = arith.constant 0 : i32
    %c0_i32_2 = arith.constant 0 : i32
    return %arg1, %c0_i32, %c0_i32_0, %c0_i32_1 : i32, i32, i32, i32
  }
  func.func @transform_6(%arg0: i32, %arg1: i32) -> (i32, i32, i32, i32) {
    %c0_i32 = arith.constant 0 : i32
    %c0_i32_0 = arith.constant 0 : i32
    %c0_i32_1 = arith.constant 0 : i32
    %c0_i32_2 = arith.constant 0 : i32
    return %arg1, %c0_i32, %c0_i32_0, %c0_i32_1 : i32, i32, i32, i32
  }
  func.func @transform_7(%arg0: i32, %arg1: i32) -> (i32, i32, i32, i32) {
    %c0_i32 = arith.constant 0 : i32
    %c0_i32_0 = arith.constant 0 : i32
    %c0_i32_1 = arith.constant 0 : i32
    %c0_i32_2 = arith.constant 0 : i32
    return %arg1, %c0_i32, %c0_i32_0, %c0_i32_1 : i32, i32, i32, i32
  }
  func.func @transform_8(%arg0: i32, %arg1: i32) -> (i32, i32, i32, i32) {
    %c0_i32 = arith.constant 0 : i32
    %c0_i32_0 = arith.constant 0 : i32
    %c0_i32_1 = arith.constant 0 : i32
    %c0_i32_2 = arith.constant 0 : i32
    return %arg1, %c0_i32, %c0_i32_0, %c0_i32_1 : i32, i32, i32, i32
  }
  func.func @transform_9(%arg0: i32, %arg1: i32) -> (i32, i32, i32, i32) {
    %c0_i32 = arith.constant 0 : i32
    %c0_i32_0 = arith.constant 0 : i32
    %c0_i32_1 = arith.constant 0 : i32
    %c0_i32_2 = arith.constant 0 : i32
    return %arg1, %c0_i32, %c0_i32_0, %c0_i32_1 : i32, i32, i32, i32
  }
  func.func @transform_10(%arg0: i32, %arg1: i32) -> (i32, i32, i32) {
    %c0_i32 = arith.constant 0 : i32
    %c0_i32_0 = arith.constant 0 : i32
    %c0_i32_1 = arith.constant 0 : i32
    return %arg1, %c0_i32, %c0_i32_0 : i32, i32, i32
  }
  func.func @transform_11(%arg0: i32, %arg1: i32) -> (i32, i32, i32) {
    %c0_i32 = arith.constant 0 : i32
    %c0_i32_0 = arith.constant 0 : i32
    %c0_i32_1 = arith.constant 0 : i32
    return %arg1, %c0_i32, %c0_i32_0 : i32, i32, i32
  }
  func.func @transform_12(%arg0: i32, %arg1: i32) -> (i32, i32, i32) {
    %c0_i32 = arith.constant 0 : i32
    %c0_i32_0 = arith.constant 0 : i32
    %c0_i32_1 = arith.constant 0 : i32
    return %arg1, %c0_i32, %c0_i32_0 : i32, i32, i32
  }
  func.func @transform_13(%arg0: i32, %arg1: i32) -> (i32, i32, i32) {
    %c0_i32 = arith.constant 0 : i32
    %c0_i32_0 = arith.constant 0 : i32
    %c0_i32_1 = arith.constant 0 : i32
    return %arg1, %c0_i32, %c0_i32_0 : i32, i32, i32
  }
  func.func @transform_14(%arg0: i32, %arg1: i32) -> (i32, i32, i32) {
    %c0_i32 = arith.constant 0 : i32
    %c0_i32_0 = arith.constant 0 : i32
    %c0_i32_1 = arith.constant 0 : i32
    return %arg1, %c0_i32, %c0_i32_0 : i32, i32, i32
  }
  func.func @transform_15(%arg0: i32, %arg1: i32) -> (i32, i32, i32) {
    %c0_i32 = arith.constant 0 : i32
    %c0_i32_0 = arith.constant 0 : i32
    %c0_i32_1 = arith.constant 0 : i32
    return %arg1, %c0_i32, %c0_i32_0 : i32, i32, i32
  }
  func.func @transform_16(%arg0: i32, %arg1: i32) -> (i32, i32, i32) {
    %c0_i32 = arith.constant 0 : i32
    %c0_i32_0 = arith.constant 0 : i32
    %c0_i32_1 = arith.constant 0 : i32
    return %arg1, %c0_i32, %c0_i32_0 : i32, i32, i32
  }
  func.func @transform_17(%arg0: i32, %arg1: i32) -> (i32, i32) {
    %c0_i32 = arith.constant 0 : i32
    %c0_i32_0 = arith.constant 0 : i32
    %c0_i32_1 = arith.constant 0 : i32
    return %c0_i32, %c0_i32_0 : i32, i32
  }
  func.func @transform_18(%arg0: i32, %arg1: i32) -> (i32, i32) {
    %c0_i32 = arith.constant 0 : i32
    %c0_i32_0 = arith.constant 0 : i32
    %c0_i32_1 = arith.constant 0 : i32
    return %c0_i32, %c0_i32_0 : i32, i32
  }
  func.func @transform_19(%arg0: i32, %arg1: i32) -> (i32, i32) {
    %c0_i32 = arith.constant 0 : i32
    %c0_i32_0 = arith.constant 0 : i32
    %c0_i32_1 = arith.constant 0 : i32
    return %c0_i32, %c0_i32_0 : i32, i32
  }
  func.func @transform_20(%arg0: i32, %arg1: i32) -> (i32, i32) {
    %c0_i32 = arith.constant 0 : i32
    %c0_i32_0 = arith.constant 0 : i32
    %c0_i32_1 = arith.constant 0 : i32
    return %c0_i32, %c0_i32_0 : i32, i32
  }
  func.func @transform_21(%arg0: i32, %arg1: i32) -> (i32, i32, i32) {
    %c0_i32 = arith.constant 0 : i32
    %c0_i32_0 = arith.constant 0 : i32
    %c0_i32_1 = arith.constant 0 : i32
    return %arg0, %c0_i32, %c0_i32_0 : i32, i32, i32
  }
}

</mosaic_0001>

<llo_original>
// kernel: gpt_forward.1
$region0: #{gpt_forward.1}
  #allocation0 [shape = 'u32[]', space=smem, size = 0x4, offset = 0x4, fixed_abs, tag = 'smem constant byte address 0x4 - core index']
  #allocation1 [shape = 'u32[72,128]{1,0:T(1,128)}', space=vmem, size = 0x9000, scoped, tag = 'internal scratch']
  #allocation2 [shape = 'f32[8,32]{1,0:T(8,128)}', space=vmem, size = 0x1000, scoped, tag = 'scratch operand']
  %s0 = inlined_call_operand.vmem [shape: f32[2,8,32], index: 0, kind: input, shape index: {}]
  %s1 = inlined_call_operand.vmem [shape: f32[2,1,32], index: 1, kind: input, shape index: {}]
  %s2 = inlined_call_operand.vmem [shape: f32[2,1,32], index: 2, kind: input, shape index: {}]
  %s3 = inlined_call_operand.vmem [shape: bf16[2,4,32,8], index: 3, kind: input, shape index: {}]
  %s4 = inlined_call_operand.vmem [shape: f32[2,4,1,8], index: 4, kind: input, shape index: {}]
  %s5 = inlined_call_operand.vmem [shape: bf16[2,4,32,8], index: 5, kind: input, shape index: {}]
  %s6 = inlined_call_operand.vmem [shape: f32[2,4,1,8], index: 6, kind: input, shape index: {}]
  %s7 = inlined_call_operand.vmem [shape: bf16[2,4,32,8], index: 7, kind: input, shape index: {}]
  %s8 = inlined_call_operand.vmem [shape: f32[2,4,1,8], index: 8, kind: input, shape index: {}]
  %s9 = inlined_call_operand.vmem [shape: bf16[2,4,8,32], index: 9, kind: input, shape index: {}]
  %s10 = inlined_call_operand.vmem [shape: f32[2,1,32], index: 10, kind: input, shape index: {}]
  %s11 = inlined_call_operand.vmem [shape: f32[2,1,32], index: 11, kind: input, shape index: {}]
  %s12 = inlined_call_operand.vmem [shape: f32[2,1,32], index: 12, kind: input, shape index: {}]
  %s13 = inlined_call_operand.vmem [shape: bf16[2,32,128], index: 13, kind: input, shape index: {}]
  %s14 = inlined_call_operand.vmem [shape: f32[2,1,128], index: 14, kind: input, shape index: {}]
  %s15 = inlined_call_operand.vmem [shape: bf16[2,128,32], index: 15, kind: input, shape index: {}]
  %s16 = inlined_call_operand.vmem [shape: f32[2,1,32], index: 16, kind: input, shape index: {}]
  %s17 = inlined_call_operand.vmem [shape: f32[1,32], index: 17, kind: input, shape index: {}]
  %s18 = inlined_call_operand.vmem [shape: f32[1,32], index: 18, kind: input, shape index: {}]
  %s19 = inlined_call_operand.vmem [shape: bf16[32,128], index: 19, kind: input, shape index: {}]
  %s20 = inlined_call_operand.vmem [shape: f32[1,128], index: 20, kind: input, shape index: {}]
  %s21 = inlined_call_operand.hbm [shape: f32[2,8,128], index: 21, kind: output, shape index: {}]
  %s22 = sld [smem:[#allocation0]]
  $region125: #{gpt_forward.1} parent=0
    _
  %s24 = ssub.s32 1, %s22
  %s25 = scalar_select 0, %s24, %s22
  $region1: #{gpt_forward.1} parent=0
    #allocation3 [shape = 'u8[8192]{0}', space=vmem, size = 0x2000, scoped, tag = 'output window, operand 0']
    #allocation4 [shape = 's32[2]{0}', space=sflag, size = 0x8, scoped, tag = 'scoped memory for gpt_forward.1']
    %26 = vsyncpa [#allocation4], 0
    %s27 = scalar_lea.sflag [#allocation4], 1
    %28 = vsyncpa %s27, 0
    loop: start=0, step=1, limit=6
    $region2: #{gpt_forward.1} parent=1 // loop_pre_header
      _
    $region3: #{gpt_forward.1} parent=1 // loop_header
      %s30 = sphi 0, %s34
      %p31 = scmp.ge.s32.totalorder %s30, 6
      %s37 = sphi 0, %s49
      %s38 = sphi 0, %s45
      %s39 = sphi 0, %s37
      %s40 = sphi 0, %s38
      %s41 = sphi 0, %s39
      %s42 = sphi 0, %s40
      %s52 = sphi 0, %s54
      %s55 = sphi 0, %s52
      %s56 = sphi 0, %s55
      %s72 = sphi 0, %s56
      %s78 = sphi 0, %s80
      %s81 = sphi 0, %s78
      %s82 = sphi 0, %s81
      %s98 = sphi 0, %s82
      %s104 = sphi 0, %s106
      %s107 = sphi 0, %s104
      %s108 = sphi 0, %s107
      %s124 = sphi 0, %s108
      %s130 = sphi 0, %s132
      %s133 = sphi 0, %s130
      %s134 = sphi 0, %s133
      %s150 = sphi 0, %s134
      %s156 = sphi 0, %s158
      %s159 = sphi 0, %s156
      %s160 = sphi 0, %s159
      %s176 = sphi 0, %s160
      %s182 = sphi 0, %s184
      %s185 = sphi 0, %s182
      %s186 = sphi 0, %s185
      %s202 = sphi 0, %s186
      %s208 = sphi 0, %s210
      %s211 = sphi 0, %s208
      %s212 = sphi 0, %s211
      %s228 = sphi 0, %s212
      %s234 = sphi 0, %s236
      %s237 = sphi 0, %s234
      %s238 = sphi 0, %s237
      %s254 = sphi 0, %s238
      %s260 = sphi 0, %s262
      %s263 = sphi 0, %s260
      %s264 = sphi 0, %s263
      %s280 = sphi 0, %s264
      %s286 = sphi 0, %s288
      %s289 = sphi 0, %s286
      %s290 = sphi 0, %s289
      %s306 = sphi 0, %s290
      %s312 = sphi 0, %s314
      %s315 = sphi 0, %s312
      %s316 = sphi 0, %s315
      %s332 = sphi 0, %s316
      %s338 = sphi 0, %s340
      %s341 = sphi 0, %s338
      %s342 = sphi 0, %s341
      %s358 = sphi 0, %s342
      %s364 = sphi 0, %s366
      %s367 = sphi 0, %s364
      %s368 = sphi 0, %s367
      %s384 = sphi 0, %s368
      %s390 = sphi 0, %s392
      %s393 = sphi 0, %s390
      %s394 = sphi 0, %s393
      %s410 = sphi 0, %s394
      %s416 = sphi 0, %s418
      %s419 = sphi 0, %s416
      %s420 = sphi 0, %s419
      %s436 = sphi 0, %s420
      %s442 = sphi 0, %s444
      %s445 = sphi 0, %s442
      %s446 = sphi 0, %s445
      %s462 = sphi 0, %s446
      %s468 = sphi 0, %s470
      %s471 = sphi 0, %s468
      %s472 = sphi 0, %s471
      %s488 = sphi 0, %s472
      %s492 = sphi 0, %s492
      %s494 = sphi 0, %s492
      %s495 = sphi 0, %s494
      %s509 = sphi 0, %s495
      %s513 = sphi 0, %s513
      %s515 = sphi 0, %s513
      %s516 = sphi 0, %s515
      %s530 = sphi 0, %s516
      %s534 = sphi 0, %s534
      %s536 = sphi 0, %s534
      %s537 = sphi 0, %s536
      %s551 = sphi 0, %s537
      %s555 = sphi 0, %s555
      %s557 = sphi 0, %s555
      %s558 = sphi 0, %s557
      %s572 = sphi 0, %s558
      %s578 = sphi 0, %s580
      %s581 = sphi 0, %s578
      %s582 = sphi 0, %s581
      %s598 = sphi 0, %s582
    $region4: #{gpt_forward.1} parent=1 // loop_header_branch
      %33 = sbr.rel (%p31) target = $region8
    $region5: #{gpt_forward.1} parent=1 // loop_body
      %s35 = ssub.s32 %s30, 1
      %s36 = ssub.s32 %s30, 2
      %s43 = sadd.s32 1, %s38
      %p44 = scmp.ge.s32.totalorder %s43, 2
      %s45 = scalar_select %p44, 0, %s43
      %s46 = sadd.s32 1, %s37
      %s47 = scalar_select %p44, %s46, %s37
      %p48 = scmp.ge.s32.totalorder %s47, 2
      %s49 = scalar_select %p48, 0, %s47
      %s50 = ssub.s32 %s37, %s49
      %p51 = scmp.eq.s32.totalorder %s50, 0
      %s53 = sadd.s32 %s52, 1
      %s54 = scalar_select %p51, %s52, %s53
      %p57 = pneg %p51
      %p58 = scmp.eq.s32.totalorder %s30, 3
      %p59 = por %p57, %p58
      %p60 = scmp.ne.s32.totalorder %s52, %s55
      %p61 = scmp.eq.s32.totalorder %s30, 0
      %p62 = por %p60, %p61
      %p63 = scmp.ne.s32.totalorder %s52, %s55
      %p64 = scmp.eq.s32.totalorder %s35, 3
      %p65 = por %p63, %p64
      %p66 = scmp.ne.s32.totalorder %s55, %s56
      %p67 = scmp.eq.s32.totalorder %s35, 0
      %p68 = por %p66, %p67
      %p69 = scmp.ne.s32.totalorder %s55, %s56
      %p70 = scmp.eq.s32.totalorder %s36, 3
      %p71 = por %p69, %p70
      %p73 = scmp.ne.s32.totalorder %s56, %s72
      %p74 = scmp.eq.s32.totalorder %s36, 0
      %p75 = por %p73, %p74
      %s76 = ssub.s32 %s38, %s45
      %p77 = scmp.eq.s32.totalorder %s76, 0
      %s79 = sadd.s32 %s78, 1
      %s80 = scalar_select %p77, %s78, %s79
      %p83 = pneg %p77
      %p84 = scmp.eq.s32.totalorder %s30, 3
      %p85 = por %p83, %p84
      %p86 = scmp.ne.s32.totalorder %s78, %s81
      %p87 = scmp.eq.s32.totalorder %s30, 0
      %p88 = por %p86, %p87
      %p89 = scmp.ne.s32.totalorder %s78, %s81
      %p90 = scmp.eq.s32.totalorder %s35, 3
      %p91 = por %p89, %p90
      %p92 = scmp.ne.s32.totalorder %s81, %s82
      %p93 = scmp.eq.s32.totalorder %s35, 0
      %p94 = por %p92, %p93
      %p95 = scmp.ne.s32.totalorder %s81, %s82
      %p96 = scmp.eq.s32.totalorder %s36, 3
      %p97 = por %p95, %p96
      %p99 = scmp.ne.s32.totalorder %s82, %s98
      %p100 = scmp.eq.s32.totalorder %s36, 0
      %p101 = por %p99, %p100
      %s102 = ssub.s32 %s38, %s45
      %p103 = scmp.eq.s32.totalorder %s102, 0
      %s105 = sadd.s32 %s104, 1
      %s106 = scalar_select %p103, %s104, %s105
      %p109 = pneg %p103
      %p110 = scmp.eq.s32.totalorder %s30, 3
      %p111 = por %p109, %p110
      %p112 = scmp.ne.s32.totalorder %s104, %s107
      %p113 = scmp.eq.s32.totalorder %s30, 0
      %p114 = por %p112, %p113
      %p115 = scmp.ne.s32.totalorder %s104, %s107
      %p116 = scmp.eq.s32.totalorder %s35, 3
      %p117 = por %p115, %p116
      %p118 = scmp.ne.s32.totalorder %s107, %s108
      %p119 = scmp.eq.s32.totalorder %s35, 0
      %p120 = por %p118, %p119
      %p121 = scmp.ne.s32.totalorder %s107, %s108
      %p122 = scmp.eq.s32.totalorder %s36, 3
      %p123 = por %p121, %p122
      %p125 = scmp.ne.s32.totalorder %s108, %s124
      %p126 = scmp.eq.s32.totalorder %s36, 0
      %p127 = por %p125, %p126
      %s128 = ssub.s32 %s38, %s45
      %p129 = scmp.eq.s32.totalorder %s128, 0
      %s131 = sadd.s32 %s130, 1
      %s132 = scalar_select %p129, %s130, %s131
      %p135 = pneg %p129
      %p136 = scmp.eq.s32.totalorder %s30, 3
      %p137 = por %p135, %p136
      %p138 = scmp.ne.s32.totalorder %s130, %s133
      %p139 = scmp.eq.s32.totalorder %s30, 0
      %p140 = por %p138, %p139
      %p141 = scmp.ne.s32.totalorder %s130, %s133
      %p142 = scmp.eq.s32.totalorder %s35, 3
      %p143 = por %p141, %p142
      %p144 = scmp.ne.s32.totalorder %s133, %s134
      %p145 = scmp.eq.s32.totalorder %s35, 0
      %p146 = por %p144, %p145
      %p147 = scmp.ne.s32.totalorder %s133, %s134
      %p148 = scmp.eq.s32.totalorder %s36, 3
      %p149 = por %p147, %p148
      %p151 = scmp.ne.s32.totalorder %s134, %s150
      %p152 = scmp.eq.s32.totalorder %s36, 0
      %p153 = por %p151, %p152
      %s154 = ssub.s32 %s38, %s45
      %p155 = scmp.eq.s32.totalorder %s154, 0
      %s157 = sadd.s32 %s156, 1
      %s158 = scalar_select %p155, %s156, %s157
      %p161 = pneg %p155
      %p162 = scmp.eq.s32.totalorder %s30, 3
      %p163 = por %p161, %p162
      %p164 = scmp.ne.s32.totalorder %s156, %s159
      %p165 = scmp.eq.s32.totalorder %s30, 0
      %p166 = por %p164, %p165
      %p167 = scmp.ne.s32.totalorder %s156, %s159
      %p168 = scmp.eq.s32.totalorder %s35, 3
      %p169 = por %p167, %p168
      %p170 = scmp.ne.s32.totalorder %s159, %s160
      %p171 = scmp.eq.s32.totalorder %s35, 0
      %p172 = por %p170, %p171
      %p173 = scmp.ne.s32.totalorder %s159, %s160
      %p174 = scmp.eq.s32.totalorder %s36, 3
      %p175 = por %p173, %p174
      %p177 = scmp.ne.s32.totalorder %s160, %s176
      %p178 = scmp.eq.s32.totalorder %s36, 0
      %p179 = por %p177, %p178
      %s180 = ssub.s32 %s38, %s45
      %p181 = scmp.eq.s32.totalorder %s180, 0
      %s183 = sadd.s32 %s182, 1
      %s184 = scalar_select %p181, %s182, %s183
      %p187 = pneg %p181
      %p188 = scmp.eq.s32.totalorder %s30, 3
      %p189 = por %p187, %p188
      %p190 = scmp.ne.s32.totalorder %s182, %s185
      %p191 = scmp.eq.s32.totalorder %s30, 0
      %p192 = por %p190, %p191
      %p193 = scmp.ne.s32.totalorder %s182, %s185
      %p194 = scmp.eq.s32.totalorder %s35, 3
      %p195 = por %p193, %p194
      %p196 = scmp.ne.s32.totalorder %s185, %s186
      %p197 = scmp.eq.s32.totalorder %s35, 0
      %p198 = por %p196, %p197
      %p199 = scmp.ne.s32.totalorder %s185, %s186
      %p200 = scmp.eq.s32.totalorder %s36, 3
      %p201 = por %p199, %p200
      %p203 = scmp.ne.s32.totalorder %s186, %s202
      %p204 = scmp.eq.s32.totalorder %s36, 0
      %p205 = por %p203, %p204
      %s206 = ssub.s32 %s38, %s45
      %p207 = scmp.eq.s32.totalorder %s206, 0
      %s209 = sadd.s32 %s208, 1
      %s210 = scalar_select %p207, %s208, %s209
      %p213 = pneg %p207
      %p214 = scmp.eq.s32.totalorder %s30, 3
      %p215 = por %p213, %p214
      %p216 = scmp.ne.s32.totalorder %s208, %s211
      %p217 = scmp.eq.s32.totalorder %s30, 0
      %p218 = por %p216, %p217
      %p219 = scmp.ne.s32.totalorder %s208, %s211
      %p220 = scmp.eq.s32.totalorder %s35, 3
      %p221 = por %p219, %p220
      %p222 = scmp.ne.s32.totalorder %s211, %s212
      %p223 = scmp.eq.s32.totalorder %s35, 0
      %p224 = por %p222, %p223
      %p225 = scmp.ne.s32.totalorder %s211, %s212
      %p226 = scmp.eq.s32.totalorder %s36, 3
      %p227 = por %p225, %p226
      %p229 = scmp.ne.s32.totalorder %s212, %s228
      %p230 = scmp.eq.s32.totalorder %s36, 0
      %p231 = por %p229, %p230
      %s232 = ssub.s32 %s38, %s45
      %p233 = scmp.eq.s32.totalorder %s232, 0
      %s235 = sadd.s32 %s234, 1
      %s236 = scalar_select %p233, %s234, %s235
      %p239 = pneg %p233
      %p240 = scmp.eq.s32.totalorder %s30, 3
      %p241 = por %p239, %p240
      %p242 = scmp.ne.s32.totalorder %s234, %s237
      %p243 = scmp.eq.s32.totalorder %s30, 0
      %p244 = por %p242, %p243
      %p245 = scmp.ne.s32.totalorder %s234, %s237
      %p246 = scmp.eq.s32.totalorder %s35, 3
      %p247 = por %p245, %p246
      %p248 = scmp.ne.s32.totalorder %s237, %s238
      %p249 = scmp.eq.s32.totalorder %s35, 0
      %p250 = por %p248, %p249
      %p251 = scmp.ne.s32.totalorder %s237, %s238
      %p252 = scmp.eq.s32.totalorder %s36, 3
      %p253 = por %p251, %p252
      %p255 = scmp.ne.s32.totalorder %s238, %s254
      %p256 = scmp.eq.s32.totalorder %s36, 0
      %p257 = por %p255, %p256
      %s258 = ssub.s32 %s38, %s45
      %p259 = scmp.eq.s32.totalorder %s258, 0
      %s261 = sadd.s32 %s260, 1
      %s262 = scalar_select %p259, %s260, %s261
      %p265 = pneg %p259
      %p266 = scmp.eq.s32.totalorder %s30, 3
      %p267 = por %p265, %p266
      %p268 = scmp.ne.s32.totalorder %s260, %s263
      %p269 = scmp.eq.s32.totalorder %s30, 0
      %p270 = por %p268, %p269
      %p271 = scmp.ne.s32.totalorder %s260, %s263
      %p272 = scmp.eq.s32.totalorder %s35, 3
      %p273 = por %p271, %p272
      %p274 = scmp.ne.s32.totalorder %s263, %s264
      %p275 = scmp.eq.s32.totalorder %s35, 0
      %p276 = por %p274, %p275
      %p277 = scmp.ne.s32.totalorder %s263, %s264
      %p278 = scmp.eq.s32.totalorder %s36, 3
      %p279 = por %p277, %p278
      %p281 = scmp.ne.s32.totalorder %s264, %s280
      %p282 = scmp.eq.s32.totalorder %s36, 0
      %p283 = por %p281, %p282
      %s284 = ssub.s32 %s38, %s45
      %p285 = scmp.eq.s32.totalorder %s284, 0
      %s287 = sadd.s32 %s286, 1
      %s288 = scalar_select %p285, %s286, %s287
      %p291 = pneg %p285
      %p292 = scmp.eq.s32.totalorder %s30, 3
      %p293 = por %p291, %p292
      %p294 = scmp.ne.s32.totalorder %s286, %s289
      %p295 = scmp.eq.s32.totalorder %s30, 0
      %p296 = por %p294, %p295
      %p297 = scmp.ne.s32.totalorder %s286, %s289
      %p298 = scmp.eq.s32.totalorder %s35, 3
      %p299 = por %p297, %p298
      %p300 = scmp.ne.s32.totalorder %s289, %s290
      %p301 = scmp.eq.s32.totalorder %s35, 0
      %p302 = por %p300, %p301
      %p303 = scmp.ne.s32.totalorder %s289, %s290
      %p304 = scmp.eq.s32.totalorder %s36, 3
      %p305 = por %p303, %p304
      %p307 = scmp.ne.s32.totalorder %s290, %s306
      %p308 = scmp.eq.s32.totalorder %s36, 0
      %p309 = por %p307, %p308
      %s310 = ssub.s32 %s38, %s45
      %p311 = scmp.eq.s32.totalorder %s310, 0
      %s313 = sadd.s32 %s312, 1
      %s314 = scalar_select %p311, %s312, %s313
      %p317 = pneg %p311
      %p318 = scmp.eq.s32.totalorder %s30, 3
      %p319 = por %p317, %p318
      %p320 = scmp.ne.s32.totalorder %s312, %s315
      %p321 = scmp.eq.s32.totalorder %s30, 0
      %p322 = por %p320, %p321
      %p323 = scmp.ne.s32.totalorder %s312, %s315
      %p324 = scmp.eq.s32.totalorder %s35, 3
      %p325 = por %p323, %p324
      %p326 = scmp.ne.s32.totalorder %s315, %s316
      %p327 = scmp.eq.s32.totalorder %s35, 0
      %p328 = por %p326, %p327
      %p329 = scmp.ne.s32.totalorder %s315, %s316
      %p330 = scmp.eq.s32.totalorder %s36, 3
      %p331 = por %p329, %p330
      %p333 = scmp.ne.s32.totalorder %s316, %s332
      %p334 = scmp.eq.s32.totalorder %s36, 0
      %p335 = por %p333, %p334
      %s336 = ssub.s32 %s38, %s45
      %p337 = scmp.eq.s32.totalorder %s336, 0
      %s339 = sadd.s32 %s338, 1
      %s340 = scalar_select %p337, %s338, %s339
      %p343 = pneg %p337
      %p344 = scmp.eq.s32.totalorder %s30, 3
      %p345 = por %p343, %p344
      %p346 = scmp.ne.s32.totalorder %s338, %s341
      %p347 = scmp.eq.s32.totalorder %s30, 0
      %p348 = por %p346, %p347
      %p349 = scmp.ne.s32.totalorder %s338, %s341
      %p350 = scmp.eq.s32.totalorder %s35, 3
      %p351 = por %p349, %p350
      %p352 = scmp.ne.s32.totalorder %s341, %s342
      %p353 = scmp.eq.s32.totalorder %s35, 0
      %p354 = por %p352, %p353
      %p355 = scmp.ne.s32.totalorder %s341, %s342
      %p356 = scmp.eq.s32.totalorder %s36, 3
      %p357 = por %p355, %p356
      %p359 = scmp.ne.s32.totalorder %s342, %s358
      %p360 = scmp.eq.s32.totalorder %s36, 0
      %p361 = por %p359, %p360
      %s362 = ssub.s32 %s38, %s45
      %p363 = scmp.eq.s32.totalorder %s362, 0
      %s365 = sadd.s32 %s364, 1
      %s366 = scalar_select %p363, %s364, %s365
      %p369 = pneg %p363
      %p370 = scmp.eq.s32.totalorder %s30, 3
      %p371 = por %p369, %p370
      %p372 = scmp.ne.s32.totalorder %s364, %s367
      %p373 = scmp.eq.s32.totalorder %s30, 0
      %p374 = por %p372, %p373
      %p375 = scmp.ne.s32.totalorder %s364, %s367
      %p376 = scmp.eq.s32.totalorder %s35, 3
      %p377 = por %p375, %p376
      %p378 = scmp.ne.s32.totalorder %s367, %s368
      %p379 = scmp.eq.s32.totalorder %s35, 0
      %p380 = por %p378, %p379
      %p381 = scmp.ne.s32.totalorder %s367, %s368
      %p382 = scmp.eq.s32.totalorder %s36, 3
      %p383 = por %p381, %p382
      %p385 = scmp.ne.s32.totalorder %s368, %s384
      %p386 = scmp.eq.s32.totalorder %s36, 0
      %p387 = por %p385, %p386
      %s388 = ssub.s32 %s38, %s45
      %p389 = scmp.eq.s32.totalorder %s388, 0
      %s391 = sadd.s32 %s390, 1
      %s392 = scalar_select %p389, %s390, %s391
      %p395 = pneg %p389
      %p396 = scmp.eq.s32.totalorder %s30, 3
      %p397 = por %p395, %p396
      %p398 = scmp.ne.s32.totalorder %s390, %s393
      %p399 = scmp.eq.s32.totalorder %s30, 0
      %p400 = por %p398, %p399
      %p401 = scmp.ne.s32.totalorder %s390, %s393
      %p402 = scmp.eq.s32.totalorder %s35, 3
      %p403 = por %p401, %p402
      %p404 = scmp.ne.s32.totalorder %s393, %s394
      %p405 = scmp.eq.s32.totalorder %s35, 0
      %p406 = por %p404, %p405
      %p407 = scmp.ne.s32.totalorder %s393, %s394
      %p408 = scmp.eq.s32.totalorder %s36, 3
      %p409 = por %p407, %p408
      %p411 = scmp.ne.s32.totalorder %s394, %s410
      %p412 = scmp.eq.s32.totalorder %s36, 0
      %p413 = por %p411, %p412
      %s414 = ssub.s32 %s38, %s45
      %p415 = scmp.eq.s32.totalorder %s414, 0
      %s417 = sadd.s32 %s416, 1
      %s418 = scalar_select %p415, %s416, %s417
      %p421 = pneg %p415
      %p422 = scmp.eq.s32.totalorder %s30, 3
      %p423 = por %p421, %p422
      %p424 = scmp.ne.s32.totalorder %s416, %s419
      %p425 = scmp.eq.s32.totalorder %s30, 0
      %p426 = por %p424, %p425
      %p427 = scmp.ne.s32.totalorder %s416, %s419
      %p428 = scmp.eq.s32.totalorder %s35, 3
      %p429 = por %p427, %p428
      %p430 = scmp.ne.s32.totalorder %s419, %s420
      %p431 = scmp.eq.s32.totalorder %s35, 0
      %p432 = por %p430, %p431
      %p433 = scmp.ne.s32.totalorder %s419, %s420
      %p434 = scmp.eq.s32.totalorder %s36, 3
      %p435 = por %p433, %p434
      %p437 = scmp.ne.s32.totalorder %s420, %s436
      %p438 = scmp.eq.s32.totalorder %s36, 0
      %p439 = por %p437, %p438
      %s440 = ssub.s32 %s38, %s45
      %p441 = scmp.eq.s32.totalorder %s440, 0
      %s443 = sadd.s32 %s442, 1
      %s444 = scalar_select %p441, %s442, %s443
      %p447 = pneg %p441
      %p448 = scmp.eq.s32.totalorder %s30, 3
      %p449 = por %p447, %p448
      %p450 = scmp.ne.s32.totalorder %s442, %s445
      %p451 = scmp.eq.s32.totalorder %s30, 0
      %p452 = por %p450, %p451
      %p453 = scmp.ne.s32.totalorder %s442, %s445
      %p454 = scmp.eq.s32.totalorder %s35, 3
      %p455 = por %p453, %p454
      %p456 = scmp.ne.s32.totalorder %s445, %s446
      %p457 = scmp.eq.s32.totalorder %s35, 0
      %p458 = por %p456, %p457
      %p459 = scmp.ne.s32.totalorder %s445, %s446
      %p460 = scmp.eq.s32.totalorder %s36, 3
      %p461 = por %p459, %p460
      %p463 = scmp.ne.s32.totalorder %s446, %s462
      %p464 = scmp.eq.s32.totalorder %s36, 0
      %p465 = por %p463, %p464
      %s466 = ssub.s32 %s38, %s45
      %p467 = scmp.eq.s32.totalorder %s466, 0
      %s469 = sadd.s32 %s468, 1
      %s470 = scalar_select %p467, %s468, %s469
      %p473 = pneg %p467
      %p474 = scmp.eq.s32.totalorder %s30, 3
      %p475 = por %p473, %p474
      %p476 = scmp.ne.s32.totalorder %s468, %s471
      %p477 = scmp.eq.s32.totalorder %s30, 0
      %p478 = por %p476, %p477
      %p479 = scmp.ne.s32.totalorder %s468, %s471
      %p480 = scmp.eq.s32.totalorder %s35, 3
      %p481 = por %p479, %p480
      %p482 = scmp.ne.s32.totalorder %s471, %s472
      %p483 = scmp.eq.s32.totalorder %s35, 0
      %p484 = por %p482, %p483
      %p485 = scmp.ne.s32.totalorder %s471, %s472
      %p486 = scmp.eq.s32.totalorder %s36, 3
      %p487 = por %p485, %p486
      %p489 = scmp.ne.s32.totalorder %s472, %s488
      %p490 = scmp.eq.s32.totalorder %s36, 0
      %p491 = por %p489, %p490
      %s493 = sadd.s32 %s492, 1
      %p496 = scmp.eq.s32.totalorder %s30, 3
      %p497 = scmp.ne.s32.totalorder %s492, %s494
      %p498 = scmp.eq.s32.totalorder %s30, 0
      %p499 = por %p497, %p498
      %p500 = scmp.ne.s32.totalorder %s492, %s494
      %p501 = scmp.eq.s32.totalorder %s35, 3
      %p502 = por %p500, %p501
      %p503 = scmp.ne.s32.totalorder %s494, %s495
      %p504 = scmp.eq.s32.totalorder %s35, 0
      %p505 = por %p503, %p504
      %p506 = scmp.ne.s32.totalorder %s494, %s495
      %p507 = scmp.eq.s32.totalorder %s36, 3
      %p508 = por %p506, %p507
      %p510 = scmp.ne.s32.totalorder %s495, %s509
      %p511 = scmp.eq.s32.totalorder %s36, 0
      %p512 = por %p510, %p511
      %s514 = sadd.s32 %s513, 1
      %p517 = scmp.eq.s32.totalorder %s30, 3
      %p518 = scmp.ne.s32.totalorder %s513, %s515
      %p519 = scmp.eq.s32.totalorder %s30, 0
      %p520 = por %p518, %p519
      %p521 = scmp.ne.s32.totalorder %s513, %s515
      %p522 = scmp.eq.s32.totalorder %s35, 3
      %p523 = por %p521, %p522
      %p524 = scmp.ne.s32.totalorder %s515, %s516
      %p525 = scmp.eq.s32.totalorder %s35, 0
      %p526 = por %p524, %p525
      %p527 = scmp.ne.s32.totalorder %s515, %s516
      %p528 = scmp.eq.s32.totalorder %s36, 3
      %p529 = por %p527, %p528
      %p531 = scmp.ne.s32.totalorder %s516, %s530
      %p532 = scmp.eq.s32.totalorder %s36, 0
      %p533 = por %p531, %p532
      %s535 = sadd.s32 %s534, 1
      %p538 = scmp.eq.s32.totalorder %s30, 3
      %p539 = scmp.ne.s32.totalorder %s534, %s536
      %p540 = scmp.eq.s32.totalorder %s30, 0
      %p541 = por %p539, %p540
      %p542 = scmp.ne.s32.totalorder %s534, %s536
      %p543 = scmp.eq.s32.totalorder %s35, 3
      %p544 = por %p542, %p543
      %p545 = scmp.ne.s32.totalorder %s536, %s537
      %p546 = scmp.eq.s32.totalorder %s35, 0
      %p547 = por %p545, %p546
      %p548 = scmp.ne.s32.totalorder %s536, %s537
      %p549 = scmp.eq.s32.totalorder %s36, 3
      %p550 = por %p548, %p549
      %p552 = scmp.ne.s32.totalorder %s537, %s551
      %p553 = scmp.eq.s32.totalorder %s36, 0
      %p554 = por %p552, %p553
      %s556 = sadd.s32 %s555, 1
      %p559 = scmp.eq.s32.totalorder %s30, 3
      %p560 = scmp.ne.s32.totalorder %s555, %s557
      %p561 = scmp.eq.s32.totalorder %s30, 0
      %p562 = por %p560, %p561
      %p563 = scmp.ne.s32.totalorder %s555, %s557
      %p564 = scmp.eq.s32.totalorder %s35, 3
      %p565 = por %p563, %p564
      %p566 = scmp.ne.s32.totalorder %s557, %s558
      %p567 = scmp.eq.s32.totalorder %s35, 0
      %p568 = por %p566, %p567
      %p569 = scmp.ne.s32.totalorder %s557, %s558
      %p570 = scmp.eq.s32.totalorder %s36, 3
      %p571 = por %p569, %p570
      %p573 = scmp.ne.s32.totalorder %s558, %s572
      %p574 = scmp.eq.s32.totalorder %s36, 0
      %p575 = por %p573, %p574
      %s576 = ssub.s32 %s37, %s49
      %p577 = scmp.eq.s32.totalorder %s576, 0
      %s579 = sadd.s32 %s578, 1
      %s580 = scalar_select %p577, %s578, %s579
      %p583 = pneg %p577
      %p584 = scmp.eq.s32.totalorder %s30, 3
      %p585 = por %p583, %p584
      %p586 = scmp.ne.s32.totalorder %s578, %s581
      %p587 = scmp.eq.s32.totalorder %s30, 0
      %p588 = por %p586, %p587
      %p589 = scmp.ne.s32.totalorder %s578, %s581
      %p590 = scmp.eq.s32.totalorder %s35, 3
      %p591 = por %p589, %p590
      %p592 = scmp.ne.s32.totalorder %s581, %s582
      %p593 = scmp.eq.s32.totalorder %s35, 0
      %p594 = por %p592, %p593
      %p595 = scmp.ne.s32.totalorder %s581, %s582
      %p596 = scmp.eq.s32.totalorder %s36, 3
      %p597 = por %p595, %p596
      %p599 = scmp.ne.s32.totalorder %s582, %s598
      %p600 = scmp.eq.s32.totalorder %s36, 0
      %p601 = por %p599, %p600
      %p602 = scmp.le.s32.totalorder 1, %s30
      %p603 = scmp.lt.s32.totalorder %s30, 5
      %p604 = pnand %p602, %p603
      %p605 = pneg %p604
      // Predicated region
      $region9: #{gpt_forward.1} parent=5 // pred_check
        _
      $region10: #{gpt_forward.1} parent=5 // pred_check_branch
        %607 = sbr.rel (%p604) target = $region12
      $region11: #{gpt_forward.1} parent=5 // pred_region
        %s608 = ssub.s32 %s30, 1
        // Predicated region
        $region13: #{gpt_forward.1} parent=11 // pred_check
          %p609 = pneg %p505
        $region14: #{gpt_forward.1} parent=11 // pred_check_branch
          %611 = sbr.rel (%p609) target = $region16
        $region15: #{gpt_forward.1} parent=11 // pred_region
          _
        $region16: #{gpt_forward.1} parent=11 // pred_fallthru
          _
        // Predicated region
        $region17: #{gpt_forward.1} parent=11 // pred_check
          %p612 = pneg %p526
        $region18: #{gpt_forward.1} parent=11 // pred_check_branch
          %614 = sbr.rel (%p612) target = $region20
        $region19: #{gpt_forward.1} parent=11 // pred_region
          _
        $region20: #{gpt_forward.1} parent=11 // pred_fallthru
          _
        // Predicated region
        $region21: #{gpt_forward.1} parent=11 // pred_check
          %p615 = pneg %p547
        $region22: #{gpt_forward.1} parent=11 // pred_check_branch
          %617 = sbr.rel (%p615) target = $region24
        $region23: #{gpt_forward.1} parent=11 // pred_region
          _
        $region24: #{gpt_forward.1} parent=11 // pred_fallthru
          _
        // Predicated region
        $region25: #{gpt_forward.1} parent=11 // pred_check
          %p618 = pneg %p568
        $region26: #{gpt_forward.1} parent=11 // pred_check_branch
          %620 = sbr.rel (%p618) target = $region28
        $region27: #{gpt_forward.1} parent=11 // pred_region
          _
        $region28: #{gpt_forward.1} parent=11 // pred_fallthru
          _
      $region12: #{gpt_forward.1} parent=5 // pred_fallthru
        _
      %p621 = scmp.lt.s32.totalorder %s30, 4
      // Predicated region
      $region29: #{gpt_forward.1} parent=5 // pred_check
        %p622 = pneg %p621
      $region30: #{gpt_forward.1} parent=5 // pred_check_branch
        %624 = sbr.rel (%p622) target = $region32
      $region31: #{gpt_forward.1} parent=5 // pred_region
        // Predicated region
        $region33: #{gpt_forward.1} parent=31 // pred_check
          %p625 = pneg %p62
        $region34: #{gpt_forward.1} parent=31 // pred_check_branch
          %627 = sbr.rel (%p625) target = $region36
        $region35: #{gpt_forward.1} parent=31 // pred_region
          %p628 = scmp.lt.s32.totalorder %s37, 1
          %s629 = scalar_select %p628, %s37, 1
          %s630 = smul.addr %s629, 8
          %s631 = scalar_lea.vmem %s0, %s630
        $region36: #{gpt_forward.1} parent=31 // pred_fallthru
          _
        // Predicated region
        $region37: #{gpt_forward.1} parent=31 // pred_check
          %p632 = pneg %p88
        $region38: #{gpt_forward.1} parent=31 // pred_check_branch
          %634 = sbr.rel (%p632) target = $region40
        $region39: #{gpt_forward.1} parent=31 // pred_region
          %p635 = scmp.lt.s32.totalorder %s38, 1
          %s636 = scalar_select %p635, %s38, 1
          %s637 = scalar_lea.vmem %s1, %s636
        $region40: #{gpt_forward.1} parent=31 // pred_fallthru
          _
        // Predicated region
        $region41: #{gpt_forward.1} parent=31 // pred_check
          %p638 = pneg %p114
        $region42: #{gpt_forward.1} parent=31 // pred_check_branch
          %640 = sbr.rel (%p638) target = $region44
        $region43: #{gpt_forward.1} parent=31 // pred_region
          %p641 = scmp.lt.s32.totalorder %s38, 1
          %s642 = scalar_select %p641, %s38, 1
          %s643 = scalar_lea.vmem %s2, %s642
        $region44: #{gpt_forward.1} parent=31 // pred_fallthru
          _
        // Predicated region
        $region45: #{gpt_forward.1} parent=31 // pred_check
          %p644 = pneg %p140
        $region46: #{gpt_forward.1} parent=31 // pred_check_branch
          %646 = sbr.rel (%p644) target = $region48
        $region47: #{gpt_forward.1} parent=31 // pred_region
          %p647 = scmp.lt.s32.totalorder %s38, 1
          %s648 = scalar_select %p647, %s38, 1
          %s649 = smul.addr %s648, 16
          %s650 = smul.addr %s649, 4
          %s651 = scalar_lea.vmem %s3, %s650
        $region48: #{gpt_forward.1} parent=31 // pred_fallthru
          _
        // Predicated region
        $region49: #{gpt_forward.1} parent=31 // pred_check
          %p652 = pneg %p166
        $region50: #{gpt_forward.1} parent=31 // pred_check_branch
          %654 = sbr.rel (%p652) target = $region52
        $region51: #{gpt_forward.1} parent=31 // pred_region
          %p655 = scmp.lt.s32.totalorder %s38, 1
          %s656 = scalar_select %p655, %s38, 1
          %s657 = smul.addr %s656, 4
          %s658 = scalar_lea.vmem %s4, %s657
        $region52: #{gpt_forward.1} parent=31 // pred_fallthru
          _
        // Predicated region
        $region53: #{gpt_forward.1} parent=31 // pred_check
          %p659 = pneg %p192
        $region54: #{gpt_forward.1} parent=31 // pred_check_branch
          %661 = sbr.rel (%p659) target = $region56
        $region55: #{gpt_forward.1} parent=31 // pred_region
          %p662 = scmp.lt.s32.totalorder %s38, 1
          %s663 = scalar_select %p662, %s38, 1
          %s664 = smul.addr %s663, 16
          %s665 = smul.addr %s664, 4
          %s666 = scalar_lea.vmem %s5, %s665
        $region56: #{gpt_forward.1} parent=31 // pred_fallthru
          _
        // Predicated region
        $region57: #{gpt_forward.1} parent=31 // pred_check
          %p667 = pneg %p218
        $region58: #{gpt_forward.1} parent=31 // pred_check_branch
          %669 = sbr.rel (%p667) target = $region60
        $region59: #{gpt_forward.1} parent=31 // pred_region
          %p670 = scmp.lt.s32.totalorder %s38, 1
          %s671 = scalar_select %p670, %s38, 1
          %s672 = smul.addr %s671, 4
          %s673 = scalar_lea.vmem %s6, %s672
        $region60: #{gpt_forward.1} parent=31 // pred_fallthru
          _
        // Predicated region
        $region61: #{gpt_forward.1} parent=31 // pred_check
          %p674 = pneg %p244
        $region62: #{gpt_forward.1} parent=31 // pred_check_branch
          %676 = sbr.rel (%p674) target = $region64
        $region63: #{gpt_forward.1} parent=31 // pred_region
          %p677 = scmp.lt.s32.totalorder %s38, 1
          %s678 = scalar_select %p677, %s38, 1
          %s679 = smul.addr %s678, 16
          %s680 = smul.addr %s679, 4
          %s681 = scalar_lea.vmem %s7, %s680
        $region64: #{gpt_forward.1} parent=31 // pred_fallthru
          _
        // Predicated region
        $region65: #{gpt_forward.1} parent=31 // pred_check
          %p682 = pneg %p270
        $region66: #{gpt_forward.1} parent=31 // pred_check_branch
          %684 = sbr.rel (%p682) target = $region68
        $region67: #{gpt_forward.1} parent=31 // pred_region
          %p685 = scmp.lt.s32.totalorder %s38, 1
          %s686 = scalar_select %p685, %s38, 1
          %s687 = smul.addr %s686, 4
          %s688 = scalar_lea.vmem %s8, %s687
        $region68: #{gpt_forward.1} parent=31 // pred_fallthru
          _
        // Predicated region
        $region69: #{gpt_forward.1} parent=31 // pred_check
          %p689 = pneg %p296
        $region70: #{gpt_forward.1} parent=31 // pred_check_branch
          %691 = sbr.rel (%p689) target = $region72
        $region71: #{gpt_forward.1} parent=31 // pred_region
          %p692 = scmp.lt.s32.totalorder %s38, 1
          %s693 = scalar_select %p692, %s38, 1
          %s694 = smul.addr %s693, 4
          %s695 = smul.addr %s694, 4
          %s696 = scalar_lea.vmem %s9, %s695
        $region72: #{gpt_forward.1} parent=31 // pred_fallthru
          _
        // Predicated region
        $region73: #{gpt_forward.1} parent=31 // pred_check
          %p697 = pneg %p322
        $region74: #{gpt_forward.1} parent=31 // pred_check_branch
          %699 = sbr.rel (%p697) target = $region76
        $region75: #{gpt_forward.1} parent=31 // pred_region
          %p700 = scmp.lt.s32.totalorder %s38, 1
          %s701 = scalar_select %p700, %s38, 1
          %s702 = scalar_lea.vmem %s10, %s701
        $region76: #{gpt_forward.1} parent=31 // pred_fallthru
          _
        // Predicated region
        $region77: #{gpt_forward.1} parent=31 // pred_check
          %p703 = pneg %p348
        $region78: #{gpt_forward.1} parent=31 // pred_check_branch
          %705 = sbr.rel (%p703) target = $region80
        $region79: #{gpt_forward.1} parent=31 // pred_region
          %p706 = scmp.lt.s32.totalorder %s38, 1
          %s707 = scalar_select %p706, %s38, 1
          %s708 = scalar_lea.vmem %s11, %s707
        $region80: #{gpt_forward.1} parent=31 // pred_fallthru
          _
        // Predicated region
        $region81: #{gpt_forward.1} parent=31 // pred_check
          %p709 = pneg %p374
        $region82: #{gpt_forward.1} parent=31 // pred_check_branch
          %711 = sbr.rel (%p709) target = $region84
        $region83: #{gpt_forward.1} parent=31 // pred_region
          %p712 = scmp.lt.s32.totalorder %s38, 1
          %s713 = scalar_select %p712, %s38, 1
          %s714 = scalar_lea.vmem %s12, %s713
        $region84: #{gpt_forward.1} parent=31 // pred_fallthru
          _
        // Predicated region
        $region85: #{gpt_forward.1} parent=31 // pred_check
          %p715 = pneg %p400
        $region86: #{gpt_forward.1} parent=31 // pred_check_branch
          %717 = sbr.rel (%p715) target = $region88
        $region87: #{gpt_forward.1} parent=31 // pred_region
          %p718 = scmp.lt.s32.totalorder %s38, 1
          %s719 = scalar_select %p718, %s38, 1
          %s720 = smul.addr %s719, 4
          %s721 = smul.addr %s720, 4
          %s722 = scalar_lea.vmem %s13, %s721
        $region88: #{gpt_forward.1} parent=31 // pred_fallthru
          _
        // Predicated region
        $region89: #{gpt_forward.1} parent=31 // pred_check
          %p723 = pneg %p426
        $region90: #{gpt_forward.1} parent=31 // pred_check_branch
          %725 = sbr.rel (%p723) target = $region92
        $region91: #{gpt_forward.1} parent=31 // pred_region
          %p726 = scmp.lt.s32.totalorder %s38, 1
          %s727 = scalar_select %p726, %s38, 1
          %s728 = scalar_lea.vmem %s14, %s727
        $region92: #{gpt_forward.1} parent=31 // pred_fallthru
          _
        // Predicated region
        $region93: #{gpt_forward.1} parent=31 // pred_check
          %p729 = pneg %p452
        $region94: #{gpt_forward.1} parent=31 // pred_check_branch
          %731 = sbr.rel (%p729) target = $region96
        $region95: #{gpt_forward.1} parent=31 // pred_region
          %p732 = scmp.lt.s32.totalorder %s38, 1
          %s733 = scalar_select %p732, %s38, 1
          %s734 = smul.addr %s733, 16
          %s735 = smul.addr %s734, 4
          %s736 = scalar_lea.vmem %s15, %s735
        $region96: #{gpt_forward.1} parent=31 // pred_fallthru
          _
        // Predicated region
        $region97: #{gpt_forward.1} parent=31 // pred_check
          %p737 = pneg %p478
        $region98: #{gpt_forward.1} parent=31 // pred_check_branch
          %739 = sbr.rel (%p737) target = $region100
        $region99: #{gpt_forward.1} parent=31 // pred_region
          %p740 = scmp.lt.s32.totalorder %s38, 1
          %s741 = scalar_select %p740, %s38, 1
          %s742 = scalar_lea.vmem %s16, %s741
        $region100: #{gpt_forward.1} parent=31 // pred_fallthru
          _
      $region32: #{gpt_forward.1} parent=5 // pred_fallthru
        _
      %p743 = scmp.le.s32.totalorder 1, %s30
      %p744 = scmp.lt.s32.totalorder %s30, 5
      %p745 = pnand %p743, %p744
      %p746 = pneg %p745
      // Predicated region
      $region101: #{gpt_forward.1} parent=5 // pred_check
        _
      $region102: #{gpt_forward.1} parent=5 // pred_check_branch
        %748 = sbr.rel (%p745) target = $region104
      $region103: #{gpt_forward.1} parent=5 // pred_region
        %s749 = ssub.s32 %s30, 1
        %p750 = scmp.lt.s32.totalorder %s39, 1
        %s751 = scalar_select %p750, %s39, 1
        %s752 = smul.addr %s751, 8
        %s753 = scalar_lea.vmem %s0, %s752
        %p754 = pneg %p68
        %p755 = pneg %p65
        %p756 = scmp.lt.s32.totalorder %s40, 1
        %s757 = scalar_select %p756, %s40, 1
        %s758 = scalar_lea.vmem %s1, %s757
        %p759 = pneg %p94
        %p760 = pneg %p91
        %p761 = scmp.lt.s32.totalorder %s40, 1
        %s762 = scalar_select %p761, %s40, 1
        %s763 = scalar_lea.vmem %s2, %s762
        %p764 = pneg %p120
        %p765 = pneg %p117
        %p766 = scmp.lt.s32.totalorder %s40, 1
        %s767 = scalar_select %p766, %s40, 1
        %s768 = smul.addr %s767, 16
        %s769 = smul.addr %s768, 4
        %s770 = scalar_lea.vmem %s3, %s769
        %p771 = pneg %p146
        %p772 = pneg %p143
        %p773 = scmp.lt.s32.totalorder %s40, 1
        %s774 = scalar_select %p773, %s40, 1
        %s775 = smul.addr %s774, 4
        %s776 = scalar_lea.vmem %s4, %s775
        %p777 = pneg %p172
        %p778 = pneg %p169
        %p779 = scmp.lt.s32.totalorder %s40, 1
        %s780 = scalar_select %p779, %s40, 1
        %s781 = smul.addr %s780, 16
        %s782 = smul.addr %s781, 4
        %s783 = scalar_lea.vmem %s5, %s782
        %p784 = pneg %p198
        %p785 = pneg %p195
        %p786 = scmp.lt.s32.totalorder %s40, 1
        %s787 = scalar_select %p786, %s40, 1
        %s788 = smul.addr %s787, 4
        %s789 = scalar_lea.vmem %s6, %s788
        %p790 = pneg %p224
        %p791 = pneg %p221
        %p792 = scmp.lt.s32.totalorder %s40, 1
        %s793 = scalar_select %p792, %s40, 1
        %s794 = smul.addr %s793, 16
        %s795 = smul.addr %s794, 4
        %s796 = scalar_lea.vmem %s7, %s795
        %p797 = pneg %p250
        %p798 = pneg %p247
        %p799 = scmp.lt.s32.totalorder %s40, 1
        %s800 = scalar_select %p799, %s40, 1
        %s801 = smul.addr %s800, 4
        %s802 = scalar_lea.vmem %s8, %s801
        %p803 = pneg %p276
        %p804 = pneg %p273
        %p805 = scmp.lt.s32.totalorder %s40, 1
        %s806 = scalar_select %p805, %s40, 1
        %s807 = smul.addr %s806, 4
        %s808 = smul.addr %s807, 4
        %s809 = scalar_lea.vmem %s9, %s808
        %p810 = pneg %p302
        %p811 = pneg %p299
        %p812 = scmp.lt.s32.totalorder %s40, 1
        %s813 = scalar_select %p812, %s40, 1
        %s814 = scalar_lea.vmem %s10, %s813
        %p815 = pneg %p328
        %p816 = pneg %p325
        %p817 = scmp.lt.s32.totalorder %s40, 1
        %s818 = scalar_select %p817, %s40, 1
        %s819 = scalar_lea.vmem %s11, %s818
        %p820 = pneg %p354
        %p821 = pneg %p351
        %p822 = scmp.lt.s32.totalorder %s40, 1
        %s823 = scalar_select %p822, %s40, 1
        %s824 = scalar_lea.vmem %s12, %s823
        %p825 = pneg %p380
        %p826 = pneg %p377
        %p827 = scmp.lt.s32.totalorder %s40, 1
        %s828 = scalar_select %p827, %s40, 1
        %s829 = smul.addr %s828, 4
        %s830 = smul.addr %s829, 4
        %s831 = scalar_lea.vmem %s13, %s830
        %p832 = pneg %p406
        %p833 = pneg %p403
        %p834 = scmp.lt.s32.totalorder %s40, 1
        %s835 = scalar_select %p834, %s40, 1
        %s836 = scalar_lea.vmem %s14, %s835
        %p837 = pneg %p432
        %p838 = pneg %p429
        %p839 = scmp.lt.s32.totalorder %s40, 1
        %s840 = scalar_select %p839, %s40, 1
        %s841 = smul.addr %s840, 16
        %s842 = smul.addr %s841, 4
        %s843 = scalar_lea.vmem %s15, %s842
        %p844 = pneg %p458
        %p845 = pneg %p455
        %p846 = scmp.lt.s32.totalorder %s40, 1
        %s847 = scalar_select %p846, %s40, 1
        %s848 = scalar_lea.vmem %s16, %s847
        %p849 = pneg %p484
        %p850 = pneg %p481
        %p851 = pneg %p505
        %p852 = pneg %p502
        %p853 = pneg %p526
        %p854 = pneg %p523
        %p855 = pneg %p547
        %p856 = pneg %p544
        %p857 = pneg %p568
        %p858 = pneg %p565
        %p859 = pneg %p594
        %p860 = pneg %p591
        %s861 = sand.u32 %s581, 1
        %s862 = scalar_lea.sflag [#allocation4], %s861
        %s863 = sand.u32 %s581, 1
        %s864 = smul.addr %s863, 8
        %s865 = scalar_lea.vmem [#allocation3], %s864
        %p866 = scmp.lt.s32.totalorder %s39, 1
        %s867 = scalar_select %p866, %s39, 1
        %s868 = smul.addr %s867, 8
        %s869 = scalar_lea.vmem %s0, %s868
        %p870 = scmp.lt.s32.totalorder %s40, 1
        %s871 = scalar_select %p870, %s40, 1
        %s872 = scalar_lea.vmem %s1, %s871
        %p873 = scmp.lt.s32.totalorder %s40, 1
        %s874 = scalar_select %p873, %s40, 1
        %s875 = scalar_lea.vmem %s2, %s874
        %p876 = scmp.lt.s32.totalorder %s40, 1
        %s877 = scalar_select %p876, %s40, 1
        %s878 = smul.addr %s877, 16
        %s879 = smul.addr %s878, 4
        %s880 = scalar_lea.vmem %s3, %s879
        %p881 = scmp.lt.s32.totalorder %s40, 1
        %s882 = scalar_select %p881, %s40, 1
        %s883 = smul.addr %s882, 4
        %s884 = scalar_lea.vmem %s4, %s883
        %p885 = scmp.lt.s32.totalorder %s40, 1
        %s886 = scalar_select %p885, %s40, 1
        %s887 = smul.addr %s886, 16
        %s888 = smul.addr %s887, 4
        %s889 = scalar_lea.vmem %s5, %s888
        %p890 = scmp.lt.s32.totalorder %s40, 1
        %s891 = scalar_select %p890, %s40, 1
        %s892 = smul.addr %s891, 4
        %s893 = scalar_lea.vmem %s6, %s892
        %p894 = scmp.lt.s32.totalorder %s40, 1
        %s895 = scalar_select %p894, %s40, 1
        %s896 = smul.addr %s895, 16
        %s897 = smul.addr %s896, 4
        %s898 = scalar_lea.vmem %s7, %s897
        %p899 = scmp.lt.s32.totalorder %s40, 1
        %s900 = scalar_select %p899, %s40, 1
        %s901 = smul.addr %s900, 4
        %s902 = scalar_lea.vmem %s8, %s901
        %p903 = scmp.lt.s32.totalorder %s40, 1
        %s904 = scalar_select %p903, %s40, 1
        %s905 = smul.addr %s904, 4
        %s906 = smul.addr %s905, 4
        %s907 = scalar_lea.vmem %s9, %s906
        %p908 = scmp.lt.s32.totalorder %s40, 1
        %s909 = scalar_select %p908, %s40, 1
        %s910 = scalar_lea.vmem %s10, %s909
        %p911 = scmp.lt.s32.totalorder %s40, 1
        %s912 = scalar_select %p911, %s40, 1
        %s913 = scalar_lea.vmem %s11, %s912
        %p914 = scmp.lt.s32.totalorder %s40, 1
        %s915 = scalar_select %p914, %s40, 1
        %s916 = scalar_lea.vmem %s12, %s915
        %p917 = scmp.lt.s32.totalorder %s40, 1
        %s918 = scalar_select %p917, %s40, 1
        %s919 = smul.addr %s918, 4
        %s920 = smul.addr %s919, 4
        %s921 = scalar_lea.vmem %s13, %s920
        %p922 = scmp.lt.s32.totalorder %s40, 1
        %s923 = scalar_select %p922, %s40, 1
        %s924 = scalar_lea.vmem %s14, %s923
        %p925 = scmp.lt.s32.totalorder %s40, 1
        %s926 = scalar_select %p925, %s40, 1
        %s927 = smul.addr %s926, 16
        %s928 = smul.addr %s927, 4
        %s929 = scalar_lea.vmem %s15, %s928
        %p930 = scmp.lt.s32.totalorder %s40, 1
        %s931 = scalar_select %p930, %s40, 1
        %s932 = scalar_lea.vmem %s16, %s931
        %p934 = scmp.eq.s32.totalorder %s40, 0
        // Predicated region
        $region105: #{gpt_forward.1} parent=103 // pred_check
          %p935 = pneg %p934
        $region106: #{gpt_forward.1} parent=103 // pred_check_branch
          %937 = sbr.rel (%p935) target = $region108
        $region107: #{gpt_forward.1} parent=103 // pred_region
          %v938 = vld [vmem:[%s869] sm:$0xff]
          %vm939 = vcmask 261120
          %940 = vst.msk [vmem:[#allocation2] sm:$0xff] %vm939, %v938
        $region108: #{gpt_forward.1} parent=103 // pred_fallthru
          _
        %v941 = vld [vmem:[#allocation2] sm:$0xff]
        %v942 = vld [vmem:[%s872] sm:$0x1]
        %v943 = vld [vmem:[%s875] sm:$0x1]
        %vm944 = vcmask 261120
        %v945 = vsel %vm944, %v941, 0.0
        %946 = vadd.xlane.f32.xlu0 %v945
        %v947 = vpop.xlane.xlu0 %946
        %v948 = vrcp.pop 32.0
        %v949 = vmul.f32 32.0, %v948
        %v950 = vsub.f32 1.0, %v949
        %v951 = vmul.f32 %v948, %v950
        %v952 = vadd.f32 %v948, %v951
        %vm953 = vweird.f32 %v948
        %v954 = vsel %vm953, %v948, %v952
        %v955 = vmul.f32 %v947, %v954
        %v956 = vsub.f32 %v941, %v955
        %v957 = vmul.f32 %v956, %v956
        %v958 = vsel %vm944, %v957, 0.0
        %959 = vadd.xlane.f32.xlu0 %v958
        %v960 = vpop.xlane.xlu0 %959
        %v961 = vmul.f32 %v960, %v954
        %v962 = vadd.f32 %v961, 1e-05
        %v963 = vrsqrt.pop %v962
        %v964 = vmul.f32 %v963, %v962
        %v965 = vmul.f32 %v964, %v963
        %v966 = vmul.f32 0.5, %v965
        %v967 = vsub.f32 1.5, %v966
        %v968 = vmul.f32 %v963, %v967
        %vm969 = vweird.f32 %v962
        %vm970 = vweird.f32 %v963
        %vm971 = vmor %vm969, %vm970
        %v972 = vsel %vm971, %v963, %v968
        %v973 = vmul.f32 %v956, %v972
        %v975 = vperm.slane %v942, 0
        %v977 = vmul.f32 %v973, %v975
        %v979 = vperm.slane %v943, 0
        %v981 = vadd.f32 %v977, %v979
        %v982 = vpack.c.bf16 %v981, %v981
        %v983 = vld [vmem:[%s880] sm:$0xf]
        %v984 = vld [vmem:[%s880 + $0x4] sm:$0xf]
        %v985 = vld [vmem:[%s880 + $0x8] sm:$0xf]
        %v986 = vld [vmem:[%s880 + $0xc] sm:$0xf]
        %v987 = vld [vmem:[%s880 + $0x10] sm:$0xf]
        %v988 = vld [vmem:[%s880 + $0x14] sm:$0xf]
        %v989 = vld [vmem:[%s880 + $0x18] sm:$0xf]
        %v990 = vld [vmem:[%s880 + $0x1c] sm:$0xf]
        %v991 = vld [vmem:[%s880 + $0x20] sm:$0xf]
        %v992 = vld [vmem:[%s880 + $0x24] sm:$0xf]
        %v993 = vld [vmem:[%s880 + $0x28] sm:$0xf]
        %v994 = vld [vmem:[%s880 + $0x2c] sm:$0xf]
        %v995 = vld [vmem:[%s880 + $0x30] sm:$0xf]
        %v996 = vld [vmem:[%s880 + $0x34] sm:$0xf]
        %v997 = vld [vmem:[%s880 + $0x38] sm:$0xf]
        %v998 = vld [vmem:[%s880 + $0x3c] sm:$0xf]
        %v999 = vld [vmem:[%s884] sm:$0x1]
        %v1000 = vld [vmem:[%s884 + $0x1] sm:$0x1]
        %v1001 = vld [vmem:[%s884 + $0x2] sm:$0x1]
        %v1002 = vld [vmem:[%s884 + $0x3] sm:$0x1]
        %v1007 = vperm.slane %v999, 0
        %v1008 = vperm.slane %v1000, 0
        %v1009 = vperm.slane %v1001, 0
        %v1010 = vperm.slane %v1002, 0
        %v1019 = vunpack.c.l.b16 %v983
        %v1020 = vunpack.c.l.b16 %v984
        %v1021 = vunpack.c.l.b16 %v985
        %v1022 = vunpack.c.l.b16 %v986
        %v1023 = vpack.c.b16 %v1020, %v1019
        %v1024 = vpack.c.b16 %v1022, %v1021
        %v1028 = vsel %vm944, %v982, 0
        %1030 = vmatpush.bf16.msra.mxu0 0
        %1031 = vmatpush.bf16.msra.mxu0 0
        %1032 = vmatpush.bf16.msra.mxu0 0
        %1033 = vmatpush.bf16.msra.mxu0 0
        %1034 = vmatpush.bf16.msra.mxu0 0
        %1035 = vmatpush.bf16.msra.mxu0 0
        %1036 = vmatpush.bf16.msra.mxu0 %v1024
        %1037 = vmatpush.bf16.msra.mxu0 %v1023
        %1038 = vmatmul.bf16.gmra.mxu0 %v1028
        %v1039 = vpop.f32.mrf.mxu0
        %v1040 = vadd.f32 %v1007, %v1039
        %v1041 = vpop.f32.mrf.mxu0
        %1042 = vdwg.mxu0
        %v1047 = vunpack.c.l.b16 %v987
        %v1048 = vunpack.c.l.b16 %v988
        %v1049 = vunpack.c.l.b16 %v989
        %v1050 = vunpack.c.l.b16 %v990
        %v1051 = vpack.c.b16 %v1048, %v1047
        %v1052 = vpack.c.b16 %v1050, %v1049
        %1055 = vmatpush.bf16.msra.mxu0 0
        %1056 = vmatpush.bf16.msra.mxu0 0
        %1057 = vmatpush.bf16.msra.mxu0 0
        %1058 = vmatpush.bf16.msra.mxu0 0
        %1059 = vmatpush.bf16.msra.mxu0 0
        %1060 = vmatpush.bf16.msra.mxu0 0
        %1061 = vmatpush.bf16.msra.mxu0 %v1052
        %1062 = vmatpush.bf16.msra.mxu0 %v1051
        %1063 = vmatmul.bf16.gmra.mxu0 %v1028
        %v1064 = vpop.f32.mrf.mxu0
        %v1065 = vadd.f32 %v1008, %v1064
        %v1066 = vpop.f32.mrf.mxu0
        %1067 = vdwg.mxu0
        %v1072 = vunpack.c.l.b16 %v991
        %v1073 = vunpack.c.l.b16 %v992
        %v1074 = vunpack.c.l.b16 %v993
        %v1075 = vunpack.c.l.b16 %v994
        %v1076 = vpack.c.b16 %v1073, %v1072
        %v1077 = vpack.c.b16 %v1075, %v1074
        %1080 = vmatpush.bf16.msra.mxu0 0
        %1081 = vmatpush.bf16.msra.mxu0 0
        %1082 = vmatpush.bf16.msra.mxu0 0
        %1083 = vmatpush.bf16.msra.mxu0 0
        %1084 = vmatpush.bf16.msra.mxu0 0
        %1085 = vmatpush.bf16.msra.mxu0 0
        %1086 = vmatpush.bf16.msra.mxu0 %v1077
        %1087 = vmatpush.bf16.msra.mxu0 %v1076
        %1088 = vmatmul.bf16.gmra.mxu0 %v1028
        %v1089 = vpop.f32.mrf.mxu0
        %v1090 = vadd.f32 %v1009, %v1089
        %v1091 = vpop.f32.mrf.mxu0
        %1092 = vdwg.mxu0
        %v1097 = vunpack.c.l.b16 %v995
        %v1098 = vunpack.c.l.b16 %v996
        %v1099 = vunpack.c.l.b16 %v997
        %v1100 = vunpack.c.l.b16 %v998
        %v1101 = vpack.c.b16 %v1098, %v1097
        %v1102 = vpack.c.b16 %v1100, %v1099
        %1105 = vmatpush.bf16.msra.mxu0 0
        %1106 = vmatpush.bf16.msra.mxu0 0
        %1107 = vmatpush.bf16.msra.mxu0 0
        %1108 = vmatpush.bf16.msra.mxu0 0
        %1109 = vmatpush.bf16.msra.mxu0 0
        %1110 = vmatpush.bf16.msra.mxu0 0
        %1111 = vmatpush.bf16.msra.mxu0 %v1102
        %1112 = vmatpush.bf16.msra.mxu0 %v1101
        %1113 = vmatmul.bf16.gmra.mxu0 %v1028
        %v1114 = vpop.f32.mrf.mxu0
        %v1115 = vadd.f32 %v1010, %v1114
        %v1116 = vpop.f32.mrf.mxu0
        %1117 = vdwg.mxu0
        %v1118 = vld [vmem:[%s889] sm:$0xf]
        %v1119 = vld [vmem:[%s889 + $0x4] sm:$0xf]
        %v1120 = vld [vmem:[%s889 + $0x8] sm:$0xf]
        %v1121 = vld [vmem:[%s889 + $0xc] sm:$0xf]
        %v1122 = vld [vmem:[%s889 + $0x10] sm:$0xf]
        %v1123 = vld [vmem:[%s889 + $0x14] sm:$0xf]
        %v1124 = vld [vmem:[%s889 + $0x18] sm:$0xf]
        %v1125 = vld [vmem:[%s889 + $0x1c] sm:$0xf]
        %v1126 = vld [vmem:[%s889 + $0x20] sm:$0xf]
        %v1127 = vld [vmem:[%s889 + $0x24] sm:$0xf]
        %v1128 = vld [vmem:[%s889 + $0x28] sm:$0xf]
        %v1129 = vld [vmem:[%s889 + $0x2c] sm:$0xf]
        %v1130 = vld [vmem:[%s889 + $0x30] sm:$0xf]
        %v1131 = vld [vmem:[%s889 + $0x34] sm:$0xf]
        %v1132 = vld [vmem:[%s889 + $0x38] sm:$0xf]
        %v1133 = vld [vmem:[%s889 + $0x3c] sm:$0xf]
        %v1134 = vld [vmem:[%s893] sm:$0x1]
        %v1135 = vld [vmem:[%s893 + $0x1] sm:$0x1]
        %v1136 = vld [vmem:[%s893 + $0x2] sm:$0x1]
        %v1137 = vld [vmem:[%s893 + $0x3] sm:$0x1]
        %v1142 = vperm.slane %v1134, 0
        %v1143 = vperm.slane %v1135, 0
        %v1144 = vperm.slane %v1136, 0
        %v1145 = vperm.slane %v1137, 0
        %v1154 = vunpack.c.l.b16 %v1118
        %v1155 = vunpack.c.l.b16 %v1119
        %v1156 = vunpack.c.l.b16 %v1120
        %v1157 = vunpack.c.l.b16 %v1121
        %v1158 = vpack.c.b16 %v1155, %v1154
        %v1159 = vpack.c.b16 %v1157, %v1156
        %1162 = vmatpush.bf16.msra.mxu0 0
        %1163 = vmatpush.bf16.msra.mxu0 0
        %1164 = vmatpush.bf16.msra.mxu0 0
        %1165 = vmatpush.bf16.msra.mxu0 0
        %1166 = vmatpush.bf16.msra.mxu0 0
        %1167 = vmatpush.bf16.msra.mxu0 0
        %1168 = vmatpush.bf16.msra.mxu0 %v1159
        %1169 = vmatpush.bf16.msra.mxu0 %v1158
        %1170 = vmatmul.bf16.gmra.mxu0 %v1028
        %v1171 = vpop.f32.mrf.mxu0
        %v1172 = vadd.f32 %v1142, %v1171
        %v1173 = vpop.f32.mrf.mxu0
        %1174 = vdwg.mxu0
        %v1179 = vunpack.c.l.b16 %v1122
        %v1180 = vunpack.c.l.b16 %v1123
        %v1181 = vunpack.c.l.b16 %v1124
        %v1182 = vunpack.c.l.b16 %v1125
        %v1183 = vpack.c.b16 %v1180, %v1179
        %v1184 = vpack.c.b16 %v1182, %v1181
        %1187 = vmatpush.bf16.msra.mxu0 0
        %1188 = vmatpush.bf16.msra.mxu0 0
        %1189 = vmatpush.bf16.msra.mxu0 0
        %1190 = vmatpush.bf16.msra.mxu0 0
        %1191 = vmatpush.bf16.msra.mxu0 0
        %1192 = vmatpush.bf16.msra.mxu0 0
        %1193 = vmatpush.bf16.msra.mxu0 %v1184
        %1194 = vmatpush.bf16.msra.mxu0 %v1183
        %1195 = vmatmul.bf16.gmra.mxu0 %v1028
        %v1196 = vpop.f32.mrf.mxu0
        %v1197 = vadd.f32 %v1143, %v1196
        %v1198 = vpop.f32.mrf.mxu0
        %1199 = vdwg.mxu0
        %v1204 = vunpack.c.l.b16 %v1126
        %v1205 = vunpack.c.l.b16 %v1127
        %v1206 = vunpack.c.l.b16 %v1128
        %v1207 = vunpack.c.l.b16 %v1129
        %v1208 = vpack.c.b16 %v1205, %v1204
        %v1209 = vpack.c.b16 %v1207, %v1206
        %1212 = vmatpush.bf16.msra.mxu0 0
        %1213 = vmatpush.bf16.msra.mxu0 0
        %1214 = vmatpush.bf16.msra.mxu0 0
        %1215 = vmatpush.bf16.msra.mxu0 0
        %1216 = vmatpush.bf16.msra.mxu0 0
        %1217 = vmatpush.bf16.msra.mxu0 0
        %1218 = vmatpush.bf16.msra.mxu0 %v1209
        %1219 = vmatpush.bf16.msra.mxu0 %v1208
        %1220 = vmatmul.bf16.gmra.mxu0 %v1028
        %v1221 = vpop.f32.mrf.mxu0
        %v1222 = vadd.f32 %v1144, %v1221
        %v1223 = vpop.f32.mrf.mxu0
        %1224 = vdwg.mxu0
        %v1229 = vunpack.c.l.b16 %v1130
        %v1230 = vunpack.c.l.b16 %v1131
        %v1231 = vunpack.c.l.b16 %v1132
        %v1232 = vunpack.c.l.b16 %v1133
        %v1233 = vpack.c.b16 %v1230, %v1229
        %v1234 = vpack.c.b16 %v1232, %v1231
        %1237 = vmatpush.bf16.msra.mxu0 0
        %1238 = vmatpush.bf16.msra.mxu0 0
        %1239 = vmatpush.bf16.msra.mxu0 0
        %1240 = vmatpush.bf16.msra.mxu0 0
        %1241 = vmatpush.bf16.msra.mxu0 0
        %1242 = vmatpush.bf16.msra.mxu0 0
        %1243 = vmatpush.bf16.msra.mxu0 %v1234
        %1244 = vmatpush.bf16.msra.mxu0 %v1233
        %1245 = vmatmul.bf16.gmra.mxu0 %v1028
        %v1246 = vpop.f32.mrf.mxu0
        %v1247 = vadd.f32 %v1145, %v1246
        %v1248 = vpop.f32.mrf.mxu0
        %1249 = vdwg.mxu0
        %v1250 = vld [vmem:[%s898] sm:$0xf]
        %v1251 = vld [vmem:[%s898 + $0x4] sm:$0xf]
        %v1252 = vld [vmem:[%s898 + $0x8] sm:$0xf]
        %v1253 = vld [vmem:[%s898 + $0xc] sm:$0xf]
        %v1254 = vld [vmem:[%s898 + $0x10] sm:$0xf]
        %v1255 = vld [vmem:[%s898 + $0x14] sm:$0xf]
        %v1256 = vld [vmem:[%s898 + $0x18] sm:$0xf]
        %v1257 = vld [vmem:[%s898 + $0x1c] sm:$0xf]
        %v1258 = vld [vmem:[%s898 + $0x20] sm:$0xf]
        %v1259 = vld [vmem:[%s898 + $0x24] sm:$0xf]
        %v1260 = vld [vmem:[%s898 + $0x28] sm:$0xf]
        %v1261 = vld [vmem:[%s898 + $0x2c] sm:$0xf]
        %v1262 = vld [vmem:[%s898 + $0x30] sm:$0xf]
        %v1263 = vld [vmem:[%s898 + $0x34] sm:$0xf]
        %v1264 = vld [vmem:[%s898 + $0x38] sm:$0xf]
        %v1265 = vld [vmem:[%s898 + $0x3c] sm:$0xf]
        %v1266 = vld [vmem:[%s902] sm:$0x1]
        %v1267 = vld [vmem:[%s902 + $0x1] sm:$0x1]
        %v1268 = vld [vmem:[%s902 + $0x2] sm:$0x1]
        %v1269 = vld [vmem:[%s902 + $0x3] sm:$0x1]
        %v1274 = vperm.slane %v1266, 0
        %v1275 = vperm.slane %v1267, 0
        %v1276 = vperm.slane %v1268, 0
        %v1277 = vperm.slane %v1269, 0
        %v1286 = vunpack.c.l.b16 %v1250
        %v1287 = vunpack.c.l.b16 %v1251
        %v1288 = vunpack.c.l.b16 %v1252
        %v1289 = vunpack.c.l.b16 %v1253
        %v1290 = vpack.c.b16 %v1287, %v1286
        %v1291 = vpack.c.b16 %v1289, %v1288
        %1294 = vmatpush.bf16.msra.mxu0 0
        %1295 = vmatpush.bf16.msra.mxu0 0
        %1296 = vmatpush.bf16.msra.mxu0 0
        %1297 = vmatpush.bf16.msra.mxu0 0
        %1298 = vmatpush.bf16.msra.mxu0 0
        %1299 = vmatpush.bf16.msra.mxu0 0
        %1300 = vmatpush.bf16.msra.mxu0 %v1291
        %1301 = vmatpush.bf16.msra.mxu0 %v1290
        %1302 = vmatmul.bf16.gmra.mxu0 %v1028
        %v1303 = vpop.f32.mrf.mxu0
        %v1304 = vadd.f32 %v1274, %v1303
        %v1305 = vpop.f32.mrf.mxu0
        %1306 = vdwg.mxu0
        %v1311 = vunpack.c.l.b16 %v1254
        %v1312 = vunpack.c.l.b16 %v1255
        %v1313 = vunpack.c.l.b16 %v1256
        %v1314 = vunpack.c.l.b16 %v1257
        %v1315 = vpack.c.b16 %v1312, %v1311
        %v1316 = vpack.c.b16 %v1314, %v1313
        %1319 = vmatpush.bf16.msra.mxu0 0
        %1320 = vmatpush.bf16.msra.mxu0 0
        %1321 = vmatpush.bf16.msra.mxu0 0
        %1322 = vmatpush.bf16.msra.mxu0 0
        %1323 = vmatpush.bf16.msra.mxu0 0
        %1324 = vmatpush.bf16.msra.mxu0 0
        %1325 = vmatpush.bf16.msra.mxu0 %v1316
        %1326 = vmatpush.bf16.msra.mxu0 %v1315
        %1327 = vmatmul.bf16.gmra.mxu0 %v1028
        %v1328 = vpop.f32.mrf.mxu0
        %v1329 = vadd.f32 %v1275, %v1328
        %v1330 = vpop.f32.mrf.mxu0
        %1331 = vdwg.mxu0
        %v1336 = vunpack.c.l.b16 %v1258
        %v1337 = vunpack.c.l.b16 %v1259
        %v1338 = vunpack.c.l.b16 %v1260
        %v1339 = vunpack.c.l.b16 %v1261
        %v1340 = vpack.c.b16 %v1337, %v1336
        %v1341 = vpack.c.b16 %v1339, %v1338
        %1344 = vmatpush.bf16.msra.mxu0 0
        %1345 = vmatpush.bf16.msra.mxu0 0
        %1346 = vmatpush.bf16.msra.mxu0 0
        %1347 = vmatpush.bf16.msra.mxu0 0
        %1348 = vmatpush.bf16.msra.mxu0 0
        %1349 = vmatpush.bf16.msra.mxu0 0
        %1350 = vmatpush.bf16.msra.mxu0 %v1341
        %1351 = vmatpush.bf16.msra.mxu0 %v1340
        %1352 = vmatmul.bf16.gmra.mxu0 %v1028
        %v1353 = vpop.f32.mrf.mxu0
        %v1354 = vadd.f32 %v1276, %v1353
        %v1355 = vpop.f32.mrf.mxu0
        %1356 = vdwg.mxu0
        %v1361 = vunpack.c.l.b16 %v1262
        %v1362 = vunpack.c.l.b16 %v1263
        %v1363 = vunpack.c.l.b16 %v1264
        %v1364 = vunpack.c.l.b16 %v1265
        %v1365 = vpack.c.b16 %v1362, %v1361
        %v1366 = vpack.c.b16 %v1364, %v1363
        %1369 = vmatpush.bf16.msra.mxu0 0
        %1370 = vmatpush.bf16.msra.mxu0 0
        %1371 = vmatpush.bf16.msra.mxu0 0
        %1372 = vmatpush.bf16.msra.mxu0 0
        %1373 = vmatpush.bf16.msra.mxu0 0
        %1374 = vmatpush.bf16.msra.mxu0 0
        %1375 = vmatpush.bf16.msra.mxu0 %v1366
        %1376 = vmatpush.bf16.msra.mxu0 %v1365
        %1377 = vmatmul.bf16.gmra.mxu0 %v1028
        %v1378 = vpop.f32.mrf.mxu0
        %v1379 = vadd.f32 %v1277, %v1378
        %v1380 = vpop.f32.mrf.mxu0
        %1381 = vdwg.mxu0
        %v1382 = vlaneseq
        %v1383 = vshrl.u32 %v1382, 7
        %v1384 = vlaneseq
        %v1385 = vand.u32 %v1384, 127
        %vm1386 = vcmp.le.s32.totalorder %v1385, %v1383
        %v1387 = vpack.c.bf16 %v1040, %v1040
        %v1388 = vpack.c.bf16 %v1065, %v1065
        %v1389 = vpack.c.bf16 %v1090, %v1090
        %v1390 = vpack.c.bf16 %v1115, %v1115
        %v1391 = vpack.c.bf16 %v1172, %v1172
        %v1392 = vpack.c.bf16 %v1197, %v1197
        %v1393 = vpack.c.bf16 %v1222, %v1222
        %v1394 = vpack.c.bf16 %v1247, %v1247
        %vm1395 = vcmask 64512
        %v1397 = vsel %vm1395, %v1387, 0
        %v1400 = vsel %vm1395, %v1391, 0
        %1402 = vmatpush.bf16.xpose.msra.mxu0 0
        %1403 = vmatpush.bf16.xpose.msra.mxu0 0
        %1404 = vmatpush.bf16.xpose.msra.mxu0 0
        %1405 = vmatpush.bf16.xpose.msra.mxu0 0
        %1406 = vmatpush.bf16.xpose.msra.mxu0 0
        %1407 = vmatpush.bf16.xpose.msra.mxu0 0
        %1408 = vmatpush.bf16.xpose.msra.mxu0 0
        %1409 = vmatpush.bf16.xpose.msra.mxu0 %v1400
        %1410 = vmatmul.bf16.gmra.mxu0 %v1397
        %v1411 = vpop.f32.mrf.mxu0
        %v1412 = vadd.f32 0.0, %v1411
        %v1413 = vpop.f32.mrf.mxu0
        %1414 = vdwg.mxu0
        %v1416 = vsel %vm1395, %v1388, 0
        %v1419 = vsel %vm1395, %v1392, 0
        %1421 = vmatpush.bf16.xpose.msra.mxu0 0
        %1422 = vmatpush.bf16.xpose.msra.mxu0 0
        %1423 = vmatpush.bf16.xpose.msra.mxu0 0
        %1424 = vmatpush.bf16.xpose.msra.mxu0 0
        %1425 = vmatpush.bf16.xpose.msra.mxu0 0
        %1426 = vmatpush.bf16.xpose.msra.mxu0 0
        %1427 = vmatpush.bf16.xpose.msra.mxu0 0
        %1428 = vmatpush.bf16.xpose.msra.mxu0 %v1419
        %1429 = vmatmul.bf16.gmra.mxu0 %v1416
        %v1430 = vpop.f32.mrf.mxu0
        %v1431 = vadd.f32 0.0, %v1430
        %v1432 = vpop.f32.mrf.mxu0
        %1433 = vdwg.mxu0
        %v1435 = vsel %vm1395, %v1389, 0
        %v1438 = vsel %vm1395, %v1393, 0
        %1440 = vmatpush.bf16.xpose.msra.mxu0 0
        %1441 = vmatpush.bf16.xpose.msra.mxu0 0
        %1442 = vmatpush.bf16.xpose.msra.mxu0 0
        %1443 = vmatpush.bf16.xpose.msra.mxu0 0
        %1444 = vmatpush.bf16.xpose.msra.mxu0 0
        %1445 = vmatpush.bf16.xpose.msra.mxu0 0
        %1446 = vmatpush.bf16.xpose.msra.mxu0 0
        %1447 = vmatpush.bf16.xpose.msra.mxu0 %v1438
        %1448 = vmatmul.bf16.gmra.mxu0 %v1435
        %v1449 = vpop.f32.mrf.mxu0
        %v1450 = vadd.f32 0.0, %v1449
        %v1451 = vpop.f32.mrf.mxu0
        %1452 = vdwg.mxu0
        %v1454 = vsel %vm1395, %v1390, 0
        %v1457 = vsel %vm1395, %v1394, 0
        %1459 = vmatpush.bf16.xpose.msra.mxu0 0
        %1460 = vmatpush.bf16.xpose.msra.mxu0 0
        %1461 = vmatpush.bf16.xpose.msra.mxu0 0
        %1462 = vmatpush.bf16.xpose.msra.mxu0 0
        %1463 = vmatpush.bf16.xpose.msra.mxu0 0
        %1464 = vmatpush.bf16.xpose.msra.mxu0 0
        %1465 = vmatpush.bf16.xpose.msra.mxu0 0
        %1466 = vmatpush.bf16.xpose.msra.mxu0 %v1457
        %1467 = vmatmul.bf16.gmra.mxu0 %v1454
        %v1468 = vpop.f32.mrf.mxu0
        %v1469 = vadd.f32 0.0, %v1468
        %v1470 = vpop.f32.mrf.mxu0
        %1471 = vdwg.mxu0
        %v1472 = vsel %vm1386, 1, 0
        %vm1473 = vcmp.eq.s32.totalorder %v1472, 1
        %v1474 = vsel %vm1473, %v1412, -1e+30
        %v1475 = vsel %vm1473, %v1431, -1e+30
        %v1476 = vsel %vm1473, %v1450, -1e+30
        %v1477 = vsel %vm1473, %v1469, -1e+30
        %v1478 = vsel %vm1395, %v1474, -inf
        %1479 = vmax.xlane.f32.xlu0 %v1478
        %v1480 = vpop.xlane.xlu0 %1479
        %v1481 = vsel %vm1395, %v1475, -inf
        %1482 = vmax.xlane.f32.xlu0 %v1481
        %v1483 = vpop.xlane.xlu0 %1482
        %v1484 = vsel %vm1395, %v1476, -inf
        %1485 = vmax.xlane.f32.xlu0 %v1484
        %v1486 = vpop.xlane.xlu0 %1485
        %v1487 = vsel %vm1395, %v1477, -inf
        %1488 = vmax.xlane.f32.xlu0 %v1487
        %v1489 = vpop.xlane.xlu0 %1488
        %v1490 = vsub.f32 %v1474, %v1480
        %v1491 = vsub.f32 %v1475, %v1483
        %v1492 = vsub.f32 %v1476, %v1486
        %v1493 = vsub.f32 %v1477, %v1489
        %v1494 = vmul.f32 %v1490, 1.442695
        %v1495 = vpow.pop %v1494
        %v1496 = vmul.f32 %v1491, 1.442695
        %v1497 = vpow.pop %v1496
        %v1498 = vmul.f32 %v1492, 1.442695
        %v1499 = vpow.pop %v1498
        %v1500 = vmul.f32 %v1493, 1.442695
        %v1501 = vpow.pop %v1500
        %v1502 = vsel %vm1395, %v1495, 0.0
        %1503 = vadd.xlane.f32.xlu0 %v1502
        %v1504 = vpop.xlane.xlu0 %1503
        %v1505 = vsel %vm1395, %v1497, 0.0
        %1506 = vadd.xlane.f32.xlu0 %v1505
        %v1507 = vpop.xlane.xlu0 %1506
        %v1508 = vsel %vm1395, %v1499, 0.0
        %1509 = vadd.xlane.f32.xlu0 %v1508
        %v1510 = vpop.xlane.xlu0 %1509
        %v1511 = vsel %vm1395, %v1501, 0.0
        %1512 = vadd.xlane.f32.xlu0 %v1511
        %v1513 = vpop.xlane.xlu0 %1512
        %v1514 = vrcp.pop %v1504
        %v1515 = vrcp.pop %v1507
        %v1516 = vrcp.pop %v1510
        %v1517 = vrcp.pop %v1513
        %v1518 = vmul.f32 %v1495, %v1514
        %v1519 = vmul.f32 %v1497, %v1515
        %v1520 = vmul.f32 %v1499, %v1516
        %v1521 = vmul.f32 %v1501, %v1517
        %v1522 = vpack.c.bf16 %v1518, %v1518
        %v1523 = vpack.c.bf16 %v1519, %v1519
        %v1524 = vpack.c.bf16 %v1520, %v1520
        %v1525 = vpack.c.bf16 %v1521, %v1521
        %v1526 = vpack.c.bf16 %v1304, %v1304
        %v1527 = vpack.c.bf16 %v1329, %v1329
        %v1528 = vpack.c.bf16 %v1354, %v1354
        %v1529 = vpack.c.bf16 %v1379, %v1379
        %v1531 = vsel %vm1395, %v1522, 0
        %vm1533 = vcmask 1043456
        %v1535 = vsel %vm1533, %v1526, 0
        %1537 = vmatpush.bf16.msra.mxu0 0
        %1538 = vmatpush.bf16.msra.mxu0 0
        %1539 = vmatpush.bf16.msra.mxu0 0
        %1540 = vmatpush.bf16.msra.mxu0 0
        %1541 = vmatpush.bf16.msra.mxu0 0
        %1542 = vmatpush.bf16.msra.mxu0 0
        %1543 = vmatpush.bf16.msra.mxu0 0
        %1544 = vmatpush.bf16.msra.mxu0 %v1535
        %1545 = vmatmul.bf16.gmra.mxu0 %v1531
        %v1546 = vpop.f32.mrf.mxu0
        %v1547 = vadd.f32 0.0, %v1546
        %v1548 = vpop.f32.mrf.mxu0
        %1549 = vdwg.mxu0
        %v1551 = vsel %vm1395, %v1523, 0
        %v1554 = vsel %vm1533, %v1527, 0
        %1556 = vmatpush.bf16.msra.mxu0 0
        %1557 = vmatpush.bf16.msra.mxu0 0
        %1558 = vmatpush.bf16.msra.mxu0 0
        %1559 = vmatpush.bf16.msra.mxu0 0
        %1560 = vmatpush.bf16.msra.mxu0 0
        %1561 = vmatpush.bf16.msra.mxu0 0
        %1562 = vmatpush.bf16.msra.mxu0 0
        %1563 = vmatpush.bf16.msra.mxu0 %v1554
        %1564 = vmatmul.bf16.gmra.mxu0 %v1551
        %v1565 = vpop.f32.mrf.mxu0
        %v1566 = vadd.f32 0.0, %v1565
        %v1567 = vpop.f32.mrf.mxu0
        %1568 = vdwg.mxu0
        %v1570 = vsel %vm1395, %v1524, 0
        %v1573 = vsel %vm1533, %v1528, 0
        %1575 = vmatpush.bf16.msra.mxu0 0
        %1576 = vmatpush.bf16.msra.mxu0 0
        %1577 = vmatpush.bf16.msra.mxu0 0
        %1578 = vmatpush.bf16.msra.mxu0 0
        %1579 = vmatpush.bf16.msra.mxu0 0
        %1580 = vmatpush.bf16.msra.mxu0 0
        %1581 = vmatpush.bf16.msra.mxu0 0
        %1582 = vmatpush.bf16.msra.mxu0 %v1573
        %1583 = vmatmul.bf16.gmra.mxu0 %v1570
        %v1584 = vpop.f32.mrf.mxu0
        %v1585 = vadd.f32 0.0, %v1584
        %v1586 = vpop.f32.mrf.mxu0
        %1587 = vdwg.mxu0
        %v1589 = vsel %vm1395, %v1525, 0
        %v1592 = vsel %vm1533, %v1529, 0
        %1594 = vmatpush.bf16.msra.mxu0 0
        %1595 = vmatpush.bf16.msra.mxu0 0
        %1596 = vmatpush.bf16.msra.mxu0 0
        %1597 = vmatpush.bf16.msra.mxu0 0
        %1598 = vmatpush.bf16.msra.mxu0 0
        %1599 = vmatpush.bf16.msra.mxu0 0
        %1600 = vmatpush.bf16.msra.mxu0 0
        %1601 = vmatpush.bf16.msra.mxu0 %v1592
        %1602 = vmatmul.bf16.gmra.mxu0 %v1589
        %v1603 = vpop.f32.mrf.mxu0
        %v1604 = vadd.f32 0.0, %v1603
        %v1605 = vpop.f32.mrf.mxu0
        %1606 = vdwg.mxu0
        %v1607 = vpack.c.bf16 %v1547, %v1547
        %v1608 = vpack.c.bf16 %v1566, %v1566
        %v1609 = vpack.c.bf16 %v1585, %v1585
        %v1610 = vpack.c.bf16 %v1604, %v1604
        %v1611 = vld [vmem:[%s907] sm:$0xf]
        %v1612 = vld [vmem:[%s907 + $0x4] sm:$0xf]
        %v1613 = vld [vmem:[%s907 + $0x8] sm:$0xf]
        %v1614 = vld [vmem:[%s907 + $0xc] sm:$0xf]
        %v1616 = vsel %vm1395, %v1607, 0
        %v1619 = vsel %vm1533, %v1611, 0
        %1621 = vmatpush.bf16.msra.mxu0 0
        %1622 = vmatpush.bf16.msra.mxu0 0
        %1623 = vmatpush.bf16.msra.mxu0 0
        %1624 = vmatpush.bf16.msra.mxu0 0
        %1625 = vmatpush.bf16.msra.mxu0 0
        %1626 = vmatpush.bf16.msra.mxu0 0
        %1627 = vmatpush.bf16.msra.mxu0 0
        %1628 = vmatpush.bf16.msra.mxu0 %v1619
        %1629 = vmatmul.bf16.gmra.mxu0 %v1616
        %v1630 = vpop.f32.mrf.mxu0
        %v1631 = vadd.f32 0.0, %v1630
        %v1632 = vpop.f32.mrf.mxu0
        %1633 = vdwg.mxu0
        %v1635 = vsel %vm1395, %v1608, 0
        %v1638 = vsel %vm1533, %v1612, 0
        %1640 = vmatpush.bf16.msra.mxu0 0
        %1641 = vmatpush.bf16.msra.mxu0 0
        %1642 = vmatpush.bf16.msra.mxu0 0
        %1643 = vmatpush.bf16.msra.mxu0 0
        %1644 = vmatpush.bf16.msra.mxu0 0
        %1645 = vmatpush.bf16.msra.mxu0 0
        %1646 = vmatpush.bf16.msra.mxu0 0
        %1647 = vmatpush.bf16.msra.mxu0 %v1638
        %1648 = vmatmul.bf16.gmra.mxu0 %v1635
        %v1649 = vpop.f32.mrf.mxu0
        %v1650 = vadd.f32 0.0, %v1649
        %v1651 = vpop.f32.mrf.mxu0
        %1652 = vdwg.mxu0
        %v1654 = vsel %vm1395, %v1609, 0
        %v1657 = vsel %vm1533, %v1613, 0
        %1659 = vmatpush.bf16.msra.mxu0 0
        %1660 = vmatpush.bf16.msra.mxu0 0
        %1661 = vmatpush.bf16.msra.mxu0 0
        %1662 = vmatpush.bf16.msra.mxu0 0
        %1663 = vmatpush.bf16.msra.mxu0 0
        %1664 = vmatpush.bf16.msra.mxu0 0
        %1665 = vmatpush.bf16.msra.mxu0 0
        %1666 = vmatpush.bf16.msra.mxu0 %v1657
        %1667 = vmatmul.bf16.gmra.mxu0 %v1654
        %v1668 = vpop.f32.mrf.mxu0
        %v1669 = vadd.f32 0.0, %v1668
        %v1670 = vpop.f32.mrf.mxu0
        %1671 = vdwg.mxu0
        %v1673 = vsel %vm1395, %v1610, 0
        %v1676 = vsel %vm1533, %v1614, 0
        %1678 = vmatpush.bf16.msra.mxu0 0
        %1679 = vmatpush.bf16.msra.mxu0 0
        %1680 = vmatpush.bf16.msra.mxu0 0
        %1681 = vmatpush.bf16.msra.mxu0 0
        %1682 = vmatpush.bf16.msra.mxu0 0
        %1683 = vmatpush.bf16.msra.mxu0 0
        %1684 = vmatpush.bf16.msra.mxu0 0
        %1685 = vmatpush.bf16.msra.mxu0 %v1676
        %1686 = vmatmul.bf16.gmra.mxu0 %v1673
        %v1687 = vpop.f32.mrf.mxu0
        %v1688 = vadd.f32 0.0, %v1687
        %v1689 = vpop.f32.mrf.mxu0
        %1690 = vdwg.mxu0
        %v1691 = vsel %vm944, %v1631, 0.0
        %v1692 = vsel %vm944, %v1650, 0.0
        %v1693 = vadd.f32 %v1691, %v1692
        %v1694 = vsel %vm944, %v1669, 0.0
        %v1695 = vadd.f32 %v1693, %v1694
        %v1696 = vsel %vm944, %v1688, 0.0
        %v1697 = vadd.f32 %v1695, %v1696
        %v1698 = vadd.f32 %v941, %v1697
        %v1699 = vld [vmem:[%s910] sm:$0x1]
        %v1701 = vperm.slane %v1699, 0
        %v1703 = vadd.f32 %v1698, %v1701
        %v1704 = vld [vmem:[%s913] sm:$0x1]
        %v1705 = vld [vmem:[%s916] sm:$0x1]
        %v1706 = vsel %vm944, %v1703, 0.0
        %1707 = vadd.xlane.f32.xlu0 %v1706
        %v1708 = vpop.xlane.xlu0 %1707
        %v1709 = vmul.f32 %v1708, %v954
        %v1710 = vsub.f32 %v1703, %v1709
        %v1711 = vmul.f32 %v1710, %v1710
        %v1712 = vsel %vm944, %v1711, 0.0
        %1713 = vadd.xlane.f32.xlu0 %v1712
        %v1714 = vpop.xlane.xlu0 %1713
        %v1715 = vmul.f32 %v1714, %v954
        %v1716 = vadd.f32 %v1715, 1e-05
        %v1717 = vrsqrt.pop %v1716
        %v1718 = vmul.f32 %v1717, %v1716
        %v1719 = vmul.f32 %v1718, %v1717
        %v1720 = vmul.f32 0.5, %v1719
        %v1721 = vsub.f32 1.5, %v1720
        %v1722 = vmul.f32 %v1717, %v1721
        %vm1723 = vweird.f32 %v1716
        %vm1724 = vweird.f32 %v1717
        %vm1725 = vmor %vm1723, %vm1724
        %v1726 = vsel %vm1725, %v1717, %v1722
        %v1727 = vmul.f32 %v1710, %v1726
        %v1729 = vperm.slane %v1704, 0
        %v1731 = vmul.f32 %v1727, %v1729
        %v1733 = vperm.slane %v1705, 0
        %v1735 = vadd.f32 %v1731, %v1733
        %v1736 = vpack.c.bf16 %v1735, %v1735
        %v1737 = vld [vmem:[%s921] sm:$0xf]
        %v1738 = vld [vmem:[%s921 + $0x4] sm:$0xf]
        %v1739 = vld [vmem:[%s921 + $0x8] sm:$0xf]
        %v1740 = vld [vmem:[%s921 + $0xc] sm:$0xf]
        %v1741 = vld [vmem:[%s924] sm:$0x1]
        %v1743 = vperm.slane %v1741, 0
        %v1749 = vunpack.c.l.b16 %v1737
        %v1750 = vunpack.c.l.b16 %v1738
        %v1751 = vunpack.c.l.b16 %v1739
        %v1752 = vunpack.c.l.b16 %v1740
        %v1753 = vpack.c.b16 %v1750, %v1749
        %v1754 = vpack.c.b16 %v1752, %v1751
        %v1758 = vsel %vm944, %v1736, 0
        %1760 = vmatpush.bf16.msra.mxu0 0
        %1761 = vmatpush.bf16.msra.mxu0 0
        %1762 = vmatpush.bf16.msra.mxu0 0
        %1763 = vmatpush.bf16.msra.mxu0 0
        %1764 = vmatpush.bf16.msra.mxu0 0
        %1765 = vmatpush.bf16.msra.mxu0 0
        %1766 = vmatpush.bf16.msra.mxu0 %v1754
        %1767 = vmatpush.bf16.msra.mxu0 %v1753
        %1768 = vmatmul.bf16.gmra.mxu0 %v1758
        %v1769 = vpop.f32.mrf.mxu0
        %v1770 = vadd.f32 %v1743, %v1769
        %v1771 = vpop.f32.mrf.mxu0
        %1772 = vdwg.mxu0
        %v1773 = vmul.f32 %v1770, 0.5
        %v1774 = vmul.f32 %v1770, 0.044715
        %v1775 = vmul.f32 %v1774, %v1770
        %v1776 = vmul.f32 %v1775, %v1770
        %v1777 = vadd.f32 %v1770, %v1776
        %v1778 = vmul.f32 %v1777, 0.7978846
        %v1779 = vtanh.pop %v1778
        %v1780 = vadd.f32 %v1779, 1.0
        %v1781 = vmul.f32 %v1773, %v1780
        %v1782 = vpack.c.bf16 %v1781, %v1781
        %v1783 = vld [vmem:[%s929] sm:$0xf]
        %v1784 = vld [vmem:[%s929 + $0x4] sm:$0xf]
        %v1785 = vld [vmem:[%s929 + $0x8] sm:$0xf]
        %v1786 = vld [vmem:[%s929 + $0xc] sm:$0xf]
        %v1787 = vld [vmem:[%s929 + $0x10] sm:$0xf]
        %v1788 = vld [vmem:[%s929 + $0x14] sm:$0xf]
        %v1789 = vld [vmem:[%s929 + $0x18] sm:$0xf]
        %v1790 = vld [vmem:[%s929 + $0x1c] sm:$0xf]
        %v1791 = vld [vmem:[%s929 + $0x20] sm:$0xf]
        %v1792 = vld [vmem:[%s929 + $0x24] sm:$0xf]
        %v1793 = vld [vmem:[%s929 + $0x28] sm:$0xf]
        %v1794 = vld [vmem:[%s929 + $0x2c] sm:$0xf]
        %v1795 = vld [vmem:[%s929 + $0x30] sm:$0xf]
        %v1796 = vld [vmem:[%s929 + $0x34] sm:$0xf]
        %v1797 = vld [vmem:[%s929 + $0x38] sm:$0xf]
        %v1798 = vld [vmem:[%s929 + $0x3c] sm:$0xf]
        %v1799 = vld [vmem:[%s932] sm:$0x1]
        %v1801 = vperm.slane %v1799, 0
        %v1819 = vunpack.c.l.b16 %v1783
        %v1820 = vunpack.c.l.b16 %v1784
        %v1821 = vunpack.c.l.b16 %v1785
        %v1822 = vunpack.c.l.b16 %v1786
        %v1823 = vunpack.c.l.b16 %v1787
        %v1824 = vunpack.c.l.b16 %v1788
        %v1825 = vunpack.c.l.b16 %v1789
        %v1826 = vunpack.c.l.b16 %v1790
        %v1827 = vunpack.c.l.b16 %v1791
        %v1828 = vunpack.c.l.b16 %v1792
        %v1829 = vunpack.c.l.b16 %v1793
        %v1830 = vunpack.c.l.b16 %v1794
        %v1831 = vunpack.c.l.b16 %v1795
        %v1832 = vunpack.c.l.b16 %v1796
        %v1833 = vunpack.c.l.b16 %v1797
        %v1834 = vunpack.c.l.b16 %v1798
        %v1835 = vpack.c.b16 %v1820, %v1819
        %v1836 = vpack.c.b16 %v1822, %v1821
        %v1837 = vpack.c.b16 %v1824, %v1823
        %v1838 = vpack.c.b16 %v1826, %v1825
        %v1839 = vpack.c.b16 %v1828, %v1827
        %v1840 = vpack.c.b16 %v1830, %v1829
        %v1841 = vpack.c.b16 %v1832, %v1831
        %v1842 = vpack.c.b16 %v1834, %v1833
        %1851 = vmatpush.bf16.msra.mxu0 %v1842
        %1852 = vmatpush.bf16.msra.mxu0 %v1841
        %1853 = vmatpush.bf16.msra.mxu0 %v1840
        %1854 = vmatpush.bf16.msra.mxu0 %v1839
        %1855 = vmatpush.bf16.msra.mxu0 %v1838
        %1856 = vmatpush.bf16.msra.mxu0 %v1837
        %1857 = vmatpush.bf16.msra.mxu0 %v1836
        %1858 = vmatpush.bf16.msra.mxu0 %v1835
        %1859 = vmatmul.bf16.gmra.mxu0 %v1782
        %v1860 = vpop.f32.mrf.mxu0
        %v1861 = vadd.f32 %v1801, %v1860
        %v1862 = vpop.f32.mrf.mxu0
        %1863 = vdwg.mxu0
        %v1864 = vadd.f32 %v1703, %v1861
        %1865 = vst.msk [vmem:[#allocation2] sm:$0xff] %vm944, %v1864
        %p1866 = scmp.eq.s32.totalorder %s40, 1
        // Predicated region
        $region109: #{gpt_forward.1} parent=103 // pred_check
          %p1867 = pneg %p1866
        $region110: #{gpt_forward.1} parent=103 // pred_check_branch
          %1869 = sbr.rel (%p1867) target = $region112
        $region111: #{gpt_forward.1} parent=103 // pred_region
          %v1870 = vld [vmem:[%s17] sm:$0x1]
          %v1871 = vld [vmem:[%s18] sm:$0x1]
          %v1872 = vsel %vm944, %v1864, 0.0
          %1873 = vadd.xlane.f32.xlu0 %v1872
          %v1874 = vpop.xlane.xlu0 %1873
          %v1875 = vmul.f32 %v1874, %v954
          %v1876 = vsub.f32 %v1864, %v1875
          %v1877 = vmul.f32 %v1876, %v1876
          %v1878 = vsel %vm944, %v1877, 0.0
          %1879 = vadd.xlane.f32.xlu0 %v1878
          %v1880 = vpop.xlane.xlu0 %1879
          %v1881 = vmul.f32 %v1880, %v954
          %v1882 = vadd.f32 %v1881, 1e-05
          %v1883 = vrsqrt.pop %v1882
          %v1884 = vmul.f32 %v1883, %v1882
          %v1885 = vmul.f32 %v1884, %v1883
          %v1886 = vmul.f32 0.5, %v1885
          %v1887 = vsub.f32 1.5, %v1886
          %v1888 = vmul.f32 %v1883, %v1887
          %vm1889 = vweird.f32 %v1882
          %vm1890 = vweird.f32 %v1883
          %vm1891 = vmor %vm1889, %vm1890
          %v1892 = vsel %vm1891, %v1883, %v1888
          %v1893 = vmul.f32 %v1876, %v1892
          %v1895 = vperm.slane %v1870, 0
          %v1897 = vmul.f32 %v1893, %v1895
          %v1899 = vperm.slane %v1871, 0
          %v1901 = vadd.f32 %v1897, %v1899
          %v1902 = vpack.c.bf16 %v1901, %v1901
          %v1903 = vld [vmem:[%s19] sm:$0xf]
          %v1904 = vld [vmem:[%s19 + $0x4] sm:$0xf]
          %v1905 = vld [vmem:[%s19 + $0x8] sm:$0xf]
          %v1906 = vld [vmem:[%s19 + $0xc] sm:$0xf]
          %v1907 = vld [vmem:[%s20] sm:$0x1]
          %v1909 = vperm.slane %v1907, 0
          %v1915 = vunpack.c.l.b16 %v1903
          %v1916 = vunpack.c.l.b16 %v1904
          %v1917 = vunpack.c.l.b16 %v1905
          %v1918 = vunpack.c.l.b16 %v1906
          %v1919 = vpack.c.b16 %v1916, %v1915
          %v1920 = vpack.c.b16 %v1918, %v1917
          %v1924 = vsel %vm944, %v1902, 0
          %1926 = vmatpush.bf16.msra.mxu0 0
          %1927 = vmatpush.bf16.msra.mxu0 0
          %1928 = vmatpush.bf16.msra.mxu0 0
          %1929 = vmatpush.bf16.msra.mxu0 0
          %1930 = vmatpush.bf16.msra.mxu0 0
          %1931 = vmatpush.bf16.msra.mxu0 0
          %1932 = vmatpush.bf16.msra.mxu0 %v1920
          %1933 = vmatpush.bf16.msra.mxu0 %v1919
          %1934 = vmatmul.bf16.gmra.mxu0 %v1924
          %v1935 = vpop.f32.mrf.mxu0
          %v1936 = vadd.f32 %v1909, %v1935
          %v1937 = vpop.f32.mrf.mxu0
          %1938 = vdwg.mxu0
          %1939 = vst [vmem:[%s865] sm:$0xff] %v1936
        $region112: #{gpt_forward.1} parent=103 // pred_fallthru
          _
        %s1940 = sand.u32 %s581, 1
        %s1941 = scalar_lea.sflag [#allocation4], %s1940
        %s1942 = sand.u32 %s581, 1
        %s1943 = smul.addr %s1942, 8
        %s1944 = scalar_lea.vmem [#allocation3], %s1943
        // Predicated region
        $region113: #{gpt_forward.1} parent=103 // pred_check
          %p1945 = pneg %p591
        $region114: #{gpt_forward.1} parent=103 // pred_check_branch
          %1947 = sbr.rel (%p1945) target = $region116
        $region115: #{gpt_forward.1} parent=103 // pred_region
          %1949 = vsyncadd %s1941, 0
          %s1950 = smul.addr %s39, 8
          %s1951 = scalar_lea.hbm %s21, %s1950
          %s1953 = sshll.u32 %s1944, 4
          %s1954 = int_to_ptr.vmem [resolvable:$true] %s1953
          %s1955 = sshll.u32 %s1951, 4
          %s1956 = int_to_ptr.hbm [resolvable:$true] %s1955
          %1958 = dma.vmem_to_hbm [thread:$0]  %s1954, 128, %s1956, %s1941
        $region116: #{gpt_forward.1} parent=103 // pred_fallthru
          _
      $region104: #{gpt_forward.1} parent=5 // pred_fallthru
        _
      %p1959 = scmp.le.s32.totalorder 2, %s30
      // Predicated region
      $region117: #{gpt_forward.1} parent=5 // pred_check
        %p1960 = pneg %p1959
      $region118: #{gpt_forward.1} parent=5 // pred_check_branch
        %1962 = sbr.rel (%p1960) target = $region120
      $region119: #{gpt_forward.1} parent=5 // pred_region
        %s1963 = ssub.s32 %s30, 2
        // Predicated region
        $region121: #{gpt_forward.1} parent=119 // pred_check
          %p1964 = pneg %p597
        $region122: #{gpt_forward.1} parent=119 // pred_check_branch
          %1966 = sbr.rel (%p1964) target = $region124
        $region123: #{gpt_forward.1} parent=119 // pred_region
          %s1967 = sand.u32 %s582, 1
          %s1968 = scalar_lea.sflag [#allocation4], %s1967
          %s1969 = sand.u32 %s582, 1
          %s1970 = smul.addr %s1969, 8
          %s1971 = scalar_lea.vmem [#allocation3], %s1970
          %1973 = dma.done %s1968, 128
        $region124: #{gpt_forward.1} parent=119 // pred_fallthru
          _
      $region120: #{gpt_forward.1} parent=5 // pred_fallthru
        _
    $region6: #{gpt_forward.1} parent=1 // loop_footer
      %s34 = sadd.s32 1, %s30
    $region7: #{gpt_forward.1} parent=1 // loop_footer_branch
      %29 = sbr.rel target = $region3
    $region8: #{gpt_forward.1} parent=1 // loop_exit
      _
    %1974 = vsyncpa [#allocation4], 1
    %s1975 = scalar_lea.sflag [#allocation4], 1
    %1976 = vsyncpa %s1975, 1

</llo_original>
